<compile_context>
chip_gen: v5e
topology: v5e:2x2
jax: 0.10.0
libtpu: 0.0.40
codegen_flags: <defaults>
</compile_context>

<pallas_src>
import functools

import jax
import jax.numpy as jnp
import numpy as np
from jax.experimental import pallas as pl
from jax.experimental.pallas import tpu as pltpu

N_QUERIES = 225   # MLP.layer_last = nn.Linear(225, 1)
N_PAD = 256       # padded query count: one full 256-row MXU pass / clean tiling


def _fused_heads_kernel(x_ref, w1_ref, b1_ref, w2_ref, b2_ref, wl_ref, w3_ref,
                        bf_ref, out_ref, xpad_ref, *, n_real, oc, matmul_dtype):
    """One grid step: `tm` batch slices of hs[-1] through BOTH fused heads."""
    tm, n_pad, c = xpad_ref.shape
    h2dim = w1_ref.shape[1]          # 2 * hidden
    o = out_ref.shape[2]             # Oc + Ob

    # Cast f32 -> matmul dtype while packing into the zero-padded scratch
    # (single VPU pass = the cast we need anyway).  Padding rows only have to
    # be finite (zero) because the zero wl entries annihilate them later; zero
    # them every step so the kernel stays correct under "parallel" semantics.
    xpad_ref[:, n_real:, :] = jnp.zeros((tm, n_pad - n_real, c), xpad_ref.dtype)
    xpad_ref[:, :n_real, :] = x_ref[...].astype(matmul_dtype)

    x2d = xpad_ref[...].reshape(tm * n_pad, c)        # n_pad % 8 == 0 -> free

    # layer 0 for both heads: (tm*256, C) @ (C, 2H), f32 accumulate
    h = jnp.dot(x2d, w1_ref[...], preferred_element_type=jnp.float32) + b1_ref[...]
    h = jnp.maximum(h, 0.0)
    # layer 1 for both heads: block-diagonal (2H, 2H) weight -> one MXU sequence
    h = jnp.dot(h.astype(matmul_dtype), w2_ref[...],
                preferred_element_type=jnp.float32) + b2_ref[...]
    h = jnp.maximum(h, 0.0)

    # layer_last (Linear(225,1)) hoisted ahead of layer 2 by associativity and
    # done as a batched weighted reduction over the query axis (VPU + XLU):
    #   v[b, :] = sum_n wl[n, :] * h[b, n, :]
    h3 = h.reshape(tm, n_pad, h2dim)
    v = jnp.sum(h3 * wl_ref[...].reshape(1, n_pad, h2dim), axis=1)   # (tm, 2H)

    # layer 2 (block-diag W3^T) + folded bias  sum(wl)*b3 + b_last
    z = jnp.dot(v, w3_ref[...], preferred_element_type=jnp.float32) + bf_ref[...]

    # sigmoid only on the bbox lanes; single lane-merged store
    lane = jax.lax.broadcasted_iota(jnp.int32, (tm, o), 1)
    z = jnp.where(lane >= oc, jax.nn.sigmoid(z), z)
    out_ref[...] = z[:, None, :].astype(out_ref.dtype)


def _prep_params(cls_params, box_params, matmul_dtype):
    """Fuse the two heads' PyTorch (out,in) weights into kernel layout.

    In a real deployment this runs once at parameter-load time, not per step.
    """
    cw1, cb1, cw2, cb2, cw3, cb3, cwl, cbl = cls_params
    bw1, bb1, bw2, bb2, bw3, bb3, bwl, bbl = box_params
    hdim, cdim = cw1.shape
    oc = cw3.shape[0]
    ob = bw3.shape[0]

    # layer 0: concatenated (C, 2H)
    w1 = jnp.concatenate([cw1.T, bw1.T], axis=1).astype(matmul_dtype)
    b1 = jnp.concatenate([cb1, bb1], axis=1).astype(jnp.float32)

    # layer 1: block-diagonal (2H, 2H)
    w2 = jnp.zeros((2 * hdim, 2 * hdim), jnp.float32)
    w2 = w2.at[:hdim, :hdim].set(cw2.T).at[hdim:, hdim:].set(bw2.T)
    w2 = w2.astype(matmul_dtype)
    b2 = jnp.concatenate([cb2, bb2], axis=1).astype(jnp.float32)

    # layer_last weights, broadcast over the hidden lanes of each head and
    # zero-padded on the query axis (annihilates the padded rows).
    wl = jnp.zeros((N_PAD, 2 * hdim), jnp.float32)
    wl = wl.at[:N_QUERIES, :hdim].set(jnp.broadcast_to(cwl.T, (N_QUERIES, hdim)))
    wl = wl.at[:N_QUERIES, hdim:].set(jnp.broadcast_to(bwl.T, (N_QUERIES, hdim)))

    # layer 2: block-diagonal (2H, Oc+Ob) and folded bias  sum(wl)*b3 + b_last
    w3 = jnp.zeros((2 * hdim, oc + ob), jnp.float32)
    w3 = w3.at[:hdim, :oc].set(cw3.T).at[hdim:, oc:].set(bw3.T)
    bf = jnp.concatenate([jnp.sum(cwl) * cb3 + cbl[0, 0],
                          jnp.sum(bwl) * bb3 + bbl[0, 0]], axis=1).astype(jnp.float32)
    return w1, b1, w2, b2, wl, w3, bf, oc, ob


def _pick_tm(batch, n, c, h2, matmul_dtype):
    """Generation-aware batch tile: 1 grid step per TensorCore, VMEM-capped."""
    try:
        n_tc = int(getattr(jax.devices()[0], "num_cores", 1) or 1)
    except Exception:  # noqa: BLE001 - be robust on exotic runtimes
        n_tc = 1
    target_steps = max(1, min(batch, n_tc))
    itm = jnp.dtype(matmul_dtype).itemsize
    # rough per-batch-slice VMEM bytes: f32 input block (double-buffered) +
    # padded matmul-dtype scratch + layer activations (f32 + cast copy, 2 layers)
    per_b = n * c * 4 * 2 + N_PAD * c * itm + N_PAD * h2 * (4 + itm) * 2
    budget = 24 << 20      # stay well inside the scoped-VMEM default on all gens
    cap = max(1, budget // max(per_b, 1))
    best = 1
    for tm in range(1, batch + 1):
        if batch % tm == 0 and tm <= cap and batch // tm >= target_steps:
            best = tm
    return best


def fused_heads(hs, cls_params, box_params, matmul_dtype=jnp.bfloat16):
    """Apply both fused MLP heads to hs[-1]; hs is the full (L, B, 225, C)."""
    L, B, N, C = hs.shape
    assert N == N_QUERIES, "layer_last is nn.Linear(225, 1)"
    w1, b1, w2, b2, wl, w3, bf, oc, ob = _prep_params(cls_params, box_params,
                                                      matmul_dtype)
    h2 = w1.shape[1]
    o = oc + ob
    tm = _pick_tm(B, N, C, h2, matmul_dtype)
    itm = jnp.dtype(matmul_dtype).itemsize

    flops = (2 * B * N_PAD * (C * h2 + h2 * h2)   # layer 0 + layer 1
             + 2 * B * N_PAD * h2                 # weighted query reduction
             + 2 * B * h2 * o)                    # layer 2
    bytes_accessed = (B * N * C * hs.dtype.itemsize
                      + (w1.size + w2.size) * itm
                      + (b1.size + b2.size + wl.size + w3.size + bf.size) * 4
                      + B * o * 4)

    kern = functools.partial(_fused_heads_kernel, n_real=N, oc=oc,
                             matmul_dtype=matmul_dtype)
    out = pl.pallas_call(
        kern,
        out_shape=jax.ShapeDtypeStruct((B, 1, o), jnp.float32),
        grid=(B // tm,),
        in_specs=[
            # read only decoder layer L-1 straight from the full hs tensor
            pl.BlockSpec((pl.Squeezed(), tm, N, C), lambda m: (L - 1, m, 0, 0)),
            pl.BlockSpec((C, h2), lambda m: (0, 0)),      # W1 (both heads)
            pl.BlockSpec((1, h2), lambda m: (0, 0)),      # b1
            pl.BlockSpec((h2, h2), lambda m: (0, 0)),     # W2 block-diag
            pl.BlockSpec((1, h2), lambda m: (0, 0)),      # b2
            pl.BlockSpec((N_PAD, h2), lambda m: (0, 0)),  # layer_last weights
            pl.BlockSpec((h2, o), lambda m: (0, 0)),      # W3 block-diag
            pl.BlockSpec((1, o), lambda m: (0, 0)),       # folded bias
        ],
        out_specs=pl.BlockSpec((tm, 1, o), lambda m: (m, 0, 0)),
        scratch_shapes=[pltpu.VMEM((tm, N_PAD, C), matmul_dtype)],
        compiler_params=pltpu.CompilerParams(dimension_semantics=("parallel",)),
        cost_estimate=pl.CostEstimate(flops=int(flops),
                                      transcendentals=int(B * ob),
                                      bytes_accessed=int(bytes_accessed)),
    )(hs, w1, b1, w2, b2, wl, w3, bf)

    logits = out[:, :, :oc]
    boxes = out[:, :, oc:]
    return logits, boxes


def csant_forward(hs, name, class_chikusei_params, class_ip_params, bbox_params,
                  matmul_dtype=jnp.bfloat16):
    """CSANT.forward head path on fusion output `hs` [L, B, 225, C]."""
    cls_params = class_chikusei_params if name == 'train_source' else class_ip_params
    logits, boxes = fused_heads(hs, cls_params, bbox_params, matmul_dtype)
    return {'pred_logits': logits, 'pred_boxes': boxes}


# ----- pure-JAX reference (PyTorch-faithful, f32) for verification -----
def _ref_mlp(hs, params, apply_sigmoid):
    w1, b1, w2, b2, w3, b3, wl, bl = params
    h = jax.nn.relu(hs @ w1.T + b1)
    h = jax.nn.relu(h @ w2.T + b2)
    h = h @ w3.T + b3                                   # (L, B, N, O)
    ht = jnp.swapaxes(h, 2, 3)                          # (L, B, O, N)
    z = ht @ wl.T + bl[..., 0]                          # (L, B, O, 1)
    z = jnp.swapaxes(z, 2, 3)                           # (L, B, 1, O)
    return jax.nn.sigmoid(z) if apply_sigmoid else z


def _init_mlp(keys, in_dim, hid, out_dim):
    s = 0.1
    return (
        s * jax.random.normal(keys[0], (hid, in_dim), jnp.float32),
        s * jax.random.normal(keys[1], (1, hid), jnp.float32),
        s * jax.random.normal(keys[2], (hid, hid), jnp.float32),
        s * jax.random.normal(keys[3], (1, hid), jnp.float32),
        s * jax.random.normal(keys[4], (out_dim, hid), jnp.float32),
        s * jax.random.normal(keys[5], (1, out_dim), jnp.float32),
        s * jax.random.normal(keys[6], (1, N_QUERIES), jnp.float32),
        s * jax.random.normal(keys[7], (1, 1), jnp.float32),
    )


if __name__ == "__main__":
    key = jax.random.PRNGKey(0)
    L, B, C = 2, 2, 32  # decoder layers, batch, hidden_dim (small synthetic)
    ks = jax.random.split(key, 25)

    hs = jax.random.normal(ks[0], (L, B, N_QUERIES, C), jnp.float32)

    # class_chikusei: 14 classes, class_ip: 16 classes, bbox_embed: 4 outputs
    chik_params = _init_mlp(ks[1:9], C, C, 14)
    ip_params = _init_mlp(ks[9:17], C, C, 16)
    bbox_params = _init_mlp(ks[17:25], C, C, 4)

    ref_logits = _ref_mlp(hs, ip_params, False)[-1]
    ref_boxes = _ref_mlp(hs, bbox_params, True)[-1]

    # --- strict check: f32 matmul path ---
    out_f32 = csant_forward(hs, 'train_target', chik_params, ip_params, bbox_params,
                            matmul_dtype=jnp.float32)
    jax.block_until_ready(out_f32)
    assert out_f32['pred_logits'].shape == (B, 1, 16)
    assert out_f32['pred_boxes'].shape == (B, 1, 4)
    np.testing.assert_allclose(np.asarray(out_f32['pred_logits']),
                               np.asarray(ref_logits), rtol=1e-3, atol=1e-4)
    np.testing.assert_allclose(np.asarray(out_f32['pred_boxes']),
                               np.asarray(ref_boxes), rtol=1e-3, atol=1e-4)

    # --- default optimized path: bf16 MXU inputs, f32 accumulation ---
    out = csant_forward(hs, 'train_target', chik_params, ip_params, bbox_params)
    jax.block_until_ready(out)
    assert out['pred_logits'].shape == (B, 1, 16)
    assert out['pred_boxes'].shape == (B, 1, 4)
    np.testing.assert_allclose(np.asarray(out['pred_logits']),
                               np.asarray(ref_logits), rtol=5e-2, atol=5e-2)
    np.testing.assert_allclose(np.asarray(out['pred_boxes']),
                               np.asarray(ref_boxes), rtol=5e-2, atol=5e-2)

    # also exercise the 'train_source' branch (class_chikusei head)
    out_src = csant_forward(hs, 'train_source', chik_params, ip_params, bbox_params)
    jax.block_until_ready(out_src)
    assert out_src['pred_logits'].shape == (B, 1, 14)

    print("KERNEL_OK")
</pallas_src>

<mosaic_0001>
module attributes {stable_mosaic.version = 11 : i64} {
  func.func @_fused_heads_kernel(%arg0: i32, %arg1: memref<1x2x225x32xf32, #tpu.memory_space<vmem>>, %arg2: memref<32x64xf32, #tpu.memory_space<vmem>>, %arg3: memref<1x64xf32, #tpu.memory_space<vmem>>, %arg4: memref<64x64xf32, #tpu.memory_space<vmem>>, %arg5: memref<1x64xf32, #tpu.memory_space<vmem>>, %arg6: memref<256x64xf32, #tpu.memory_space<vmem>>, %arg7: memref<64x20xf32, #tpu.memory_space<vmem>>, %arg8: memref<1x20xf32, #tpu.memory_space<vmem>>, %arg9: memref<2x1x20xf32, #tpu.memory_space<vmem>>, %arg10: memref<2x256x32xf32, #tpu.memory_space<vmem>>) attributes {dimension_semantics = [#tpu.dimension_semantics<parallel>], iteration_bounds = array<i64: 1>, scalar_prefetch = 0 : i64, scratch_operands = 1 : i64, tpu.core_type = #tpu.core_type<tc>, window_params = [{transform_indices = @transform_0, window_bounds = array<i64: 1, 2, 225, 32>}, {pipeline_mode = #tpu.pipeline_mode<synchronous>, transform_indices = @transform_1, window_bounds = array<i64: 32, 64>}, {pipeline_mode = #tpu.pipeline_mode<synchronous>, transform_indices = @transform_2, window_bounds = array<i64: 1, 64>}, {pipeline_mode = #tpu.pipeline_mode<synchronous>, transform_indices = @transform_3, window_bounds = array<i64: 64, 64>}, {pipeline_mode = #tpu.pipeline_mode<synchronous>, transform_indices = @transform_4, window_bounds = array<i64: 1, 64>}, {pipeline_mode = #tpu.pipeline_mode<synchronous>, transform_indices = @transform_5, window_bounds = array<i64: 256, 64>}, {pipeline_mode = #tpu.pipeline_mode<synchronous>, transform_indices = @transform_6, window_bounds = array<i64: 64, 20>}, {pipeline_mode = #tpu.pipeline_mode<synchronous>, transform_indices = @transform_7, window_bounds = array<i64: 1, 20>}, {transform_indices = @transform_8, window_bounds = array<i64: 2, 1, 20>}]} {
    %cst = arith.constant 0.000000e+00 : f32
    %0 = vector.broadcast %cst : f32 to vector<2x31x32xf32>
    %c0 = arith.constant 0 : index
    %c225 = arith.constant 225 : index
    %c0_0 = arith.constant 0 : index
    %1 = vector.load %arg10[%c0, %c225, %c0_0] : memref<2x256x32xf32, #tpu.memory_space<vmem>>, vector<2x31x32xf32>
    tpu.vector_store %arg10[%c0, %c225, %c0_0], %0 {strides = array<i32>} : memref<2x256x32xf32, #tpu.memory_space<vmem>>, vector<2x31x32xf32>,
    %c0_1 = arith.constant 0 : index
    %c0_2 = arith.constant 0 : index
    %c0_3 = arith.constant 0 : index
    %c0_4 = arith.constant 0 : index
    %2 = vector.load %arg1[%c0_1, %c0_2, %c0_3, %c0_4] : memref<1x2x225x32xf32, #tpu.memory_space<vmem>>, vector<1x2x225x32xf32>
    %3 = vector.shape_cast %2 : vector<1x2x225x32xf32> to vector<2x225x32xf32>
    %c0_5 = arith.constant 0 : index
    %c0_6 = arith.constant 0 : index
    %c0_7 = arith.constant 0 : index
    %4 = vector.load %arg10[%c0_5, %c0_6, %c0_7] : memref<2x256x32xf32, #tpu.memory_space<vmem>>, vector<2x225x32xf32>
    tpu.vector_store %arg10[%c0_5, %c0_6, %c0_7], %3 {strides = array<i32>} : memref<2x256x32xf32, #tpu.memory_space<vmem>>, vector<2x225x32xf32>,
    %c0_8 = arith.constant 0 : index
    %c0_9 = arith.constant 0 : index
    %c0_10 = arith.constant 0 : index
    %5 = vector.load %arg10[%c0_8, %c0_9, %c0_10] : memref<2x256x32xf32, #tpu.memory_space<vmem>>, vector<2x256x32xf32>
    %6 = vector.shape_cast %5 : vector<2x256x32xf32> to vector<512x32xf32>
    %c0_11 = arith.constant 0 : index
    %c0_12 = arith.constant 0 : index
    %7 = vector.load %arg2[%c0_11, %c0_12] : memref<32x64xf32, #tpu.memory_space<vmem>>, vector<32x64xf32>
    %cst_13 = arith.constant dense<0.000000e+00> : vector<512x64xf32>
    %8 = tpu.matmul %6, %7, %cst_13 {dimension_numbers = #tpu.dot_dimension_numbers<[1], [0], [0], [1], [0, 0, 1, 1], [], []>} : vector<512x32xf32>, vector<32x64xf32>, vector<512x64xf32> -> vector<512x64xf32>
    %c0_14 = arith.constant 0 : index
    %c0_15 = arith.constant 0 : index
    %9 = vector.load %arg3[%c0_14, %c0_15] : memref<1x64xf32, #tpu.memory_space<vmem>>, vector<1x64xf32>
    %10 = vector.broadcast %9 : vector<1x64xf32> to vector<512x64xf32>
    %11 = arith.addf %8, %10 : vector<512x64xf32>
    %cst_16 = arith.constant 0.000000e+00 : f32
    %12 = vector.broadcast %cst_16 : f32 to vector<512x64xf32>
    %13 = arith.maximumf %11, %12 : vector<512x64xf32>
    %c0_17 = arith.constant 0 : index
    %c0_18 = arith.constant 0 : index
    %14 = vector.load %arg4[%c0_17, %c0_18] : memref<64x64xf32, #tpu.memory_space<vmem>>, vector<64x64xf32>
    %cst_19 = arith.constant dense<0.000000e+00> : vector<512x64xf32>
    %15 = tpu.matmul %13, %14, %cst_19 {dimension_numbers = #tpu.dot_dimension_numbers<[1], [0], [0], [1], [0, 0, 1, 1], [], []>} : vector<512x64xf32>, vector<64x64xf32>, vector<512x64xf32> -> vector<512x64xf32>
    %c0_20 = arith.constant 0 : index
    %c0_21 = arith.constant 0 : index
    %16 = vector.load %arg5[%c0_20, %c0_21] : memref<1x64xf32, #tpu.memory_space<vmem>>, vector<1x64xf32>
    %17 = vector.broadcast %16 : vector<1x64xf32> to vector<512x64xf32>
    %18 = arith.addf %15, %17 : vector<512x64xf32>
    %cst_22 = arith.constant 0.000000e+00 : f32
    %19 = vector.broadcast %cst_22 : f32 to vector<512x64xf32>
    %20 = arith.maximumf %18, %19 : vector<512x64xf32>
    %21 = vector.shape_cast %20 : vector<512x64xf32> to vector<2x256x64xf32>
    %c0_23 = arith.constant 0 : index
    %c0_24 = arith.constant 0 : index
    %22 = vector.load %arg6[%c0_23, %c0_24] : memref<256x64xf32, #tpu.memory_space<vmem>>, vector<256x64xf32>
    %23 = vector.shape_cast %22 : vector<256x64xf32> to vector<1x256x64xf32>
    %24 = vector.broadcast %23 : vector<1x256x64xf32> to vector<2x256x64xf32>
    %25 = arith.mulf %21, %24 : vector<2x256x64xf32>
    %cst_25 = arith.constant dense<0.000000e+00> : vector<2x64xf32>
    %26 = vector.multi_reduction <add>, %25, %cst_25 [1] : vector<2x256x64xf32> to vector<2x64xf32>
    %c0_26 = arith.constant 0 : index
    %c0_27 = arith.constant 0 : index
    %27 = vector.load %arg7[%c0_26, %c0_27] : memref<64x20xf32, #tpu.memory_space<vmem>>, vector<64x20xf32>
    %cst_28 = arith.constant dense<0.000000e+00> : vector<2x20xf32>
    %28 = tpu.matmul %26, %27, %cst_28 {dimension_numbers = #tpu.dot_dimension_numbers<[1], [0], [0], [1], [0, 0, 1, 1], [], []>} : vector<2x64xf32>, vector<64x20xf32>, vector<2x20xf32> -> vector<2x20xf32>
    %c0_29 = arith.constant 0 : index
    %c0_30 = arith.constant 0 : index
    %29 = vector.load %arg8[%c0_29, %c0_30] : memref<1x20xf32, #tpu.memory_space<vmem>>, vector<1x20xf32>
    %30 = vector.broadcast %29 : vector<1x20xf32> to vector<2x20xf32>
    %31 = arith.addf %28, %30 : vector<2x20xf32>
    %32 = tpu.iota {dimensions = array<i32: 1>} : vector<2x20xi32>
    %c16_i32 = arith.constant 16 : i32
    %33 = vector.broadcast %c16_i32 : i32 to vector<2x20xi32>
    %34 = arith.cmpi sge, %32, %33 : vector<2x20xi32>
    %35 = arith.negf %31 : vector<2x20xf32>
    %36 = math.exp %35 : vector<2x20xf32>
    %cst_31 = arith.constant 1.000000e+00 : f32
    %37 = vector.broadcast %cst_31 : f32 to vector<2x20xf32>
    %38 = arith.addf %37, %36 : vector<2x20xf32>
    %39 = arith.divf %37, %38 : vector<2x20xf32>
    %40 = arith.select %34, %39, %31 : vector<2x20xi1>, vector<2x20xf32>
    %41 = vector.shape_cast %40 : vector<2x20xf32> to vector<2x1x20xf32>
    %c0_32 = arith.constant 0 : index
    %c0_33 = arith.constant 0 : index
    %c0_34 = arith.constant 0 : index
    %42 = vector.load %arg9[%c0_32, %c0_33, %c0_34] : memref<2x1x20xf32, #tpu.memory_space<vmem>>, vector<2x1x20xf32>
    tpu.vector_store %arg9[%c0_32, %c0_33, %c0_34], %41 {strides = array<i32>} : memref<2x1x20xf32, #tpu.memory_space<vmem>>, vector<2x1x20xf32>,
    return
  }
  func.func @transform_0(%arg0: i32) -> (i32, i32, i32, i32) {
    %c1_i32 = arith.constant 1 : i32
    %c0_i32 = arith.constant 0 : i32
    %c0_i32_0 = arith.constant 0 : i32
    %c0_i32_1 = arith.constant 0 : i32
    return %c1_i32, %arg0, %c0_i32, %c0_i32_0 : i32, i32, i32, i32
  }
  func.func @transform_1(%arg0: i32) -> (i32, i32) {
    %c0_i32 = arith.constant 0 : i32
    %c0_i32_0 = arith.constant 0 : i32
    %c0_i32_1 = arith.constant 0 : i32
    return %c0_i32, %c0_i32_0 : i32, i32
  }
  func.func @transform_2(%arg0: i32) -> (i32, i32) {
    %c0_i32 = arith.constant 0 : i32
    %c0_i32_0 = arith.constant 0 : i32
    %c0_i32_1 = arith.constant 0 : i32
    return %c0_i32, %c0_i32_0 : i32, i32
  }
  func.func @transform_3(%arg0: i32) -> (i32, i32) {
    %c0_i32 = arith.constant 0 : i32
    %c0_i32_0 = arith.constant 0 : i32
    %c0_i32_1 = arith.constant 0 : i32
    return %c0_i32, %c0_i32_0 : i32, i32
  }
  func.func @transform_4(%arg0: i32) -> (i32, i32) {
    %c0_i32 = arith.constant 0 : i32
    %c0_i32_0 = arith.constant 0 : i32
    %c0_i32_1 = arith.constant 0 : i32
    return %c0_i32, %c0_i32_0 : i32, i32
  }
  func.func @transform_5(%arg0: i32) -> (i32, i32) {
    %c0_i32 = arith.constant 0 : i32
    %c0_i32_0 = arith.constant 0 : i32
    %c0_i32_1 = arith.constant 0 : i32
    return %c0_i32, %c0_i32_0 : i32, i32
  }
  func.func @transform_6(%arg0: i32) -> (i32, i32) {
    %c0_i32 = arith.constant 0 : i32
    %c0_i32_0 = arith.constant 0 : i32
    %c0_i32_1 = arith.constant 0 : i32
    return %c0_i32, %c0_i32_0 : i32, i32
  }
  func.func @transform_7(%arg0: i32) -> (i32, i32) {
    %c0_i32 = arith.constant 0 : i32
    %c0_i32_0 = arith.constant 0 : i32
    %c0_i32_1 = arith.constant 0 : i32
    return %c0_i32, %c0_i32_0 : i32, i32
  }
  func.func @transform_8(%arg0: i32) -> (i32, i32, i32) {
    %c0_i32 = arith.constant 0 : i32
    %c0_i32_0 = arith.constant 0 : i32
    %c0_i32_1 = arith.constant 0 : i32
    return %arg0, %c0_i32, %c0_i32_0 : i32, i32, i32
  }
}

</mosaic_0001>

<llo_original>
// kernel: tpu_custom_call.1
$region0: #{tpu_custom_call.1}
  #allocation0 [shape = 'u32[]', space=smem, size = 0x4, offset = 0x4, fixed_abs, tag = 'smem constant byte address 0x4 - core index']
  #allocation1 [shape = 'u32[72,128]{1,0:T(1,128)}', space=vmem, size = 0x9000, scoped, tag = 'internal scratch']
  #allocation2 [shape = 'f32[2,256,32]{2,1,0:T(8,128)}', space=vmem, size = 0x40000, scoped, tag = 'scratch operand']
  %s0 = inlined_call_operand.vmem [shape: f32[2,2,225,32], index: 0, kind: input, shape index: {}]
  %s1 = inlined_call_operand.vmem [shape: f32[32,64], index: 1, kind: input, shape index: {}]
  %s2 = inlined_call_operand.vmem [shape: f32[1,64], index: 2, kind: input, shape index: {}]
  %s3 = inlined_call_operand.vmem [shape: f32[64,64], index: 3, kind: input, shape index: {}]
  %s4 = inlined_call_operand.vmem [shape: f32[1,64], index: 4, kind: input, shape index: {}]
  %s5 = inlined_call_operand.vmem [shape: f32[256,64], index: 5, kind: input, shape index: {}]
  %s6 = inlined_call_operand.vmem [shape: f32[64,20], index: 6, kind: input, shape index: {}]
  %s7 = inlined_call_operand.vmem [shape: f32[1,20], index: 7, kind: input, shape index: {}]
  %s8 = inlined_call_operand.hbm [shape: f32[2,1,20], index: 8, kind: output, shape index: {}]
  %s9 = sld [smem:[#allocation0]]
  $region42: #{tpu_custom_call.1} parent=0
    _
  %s11 = ssub.s32 1, %s9
  %s12 = scalar_select 0, %s11, %s9
  $region1: #{tpu_custom_call.1} parent=0
    #allocation3 [shape = 'u8[1024]{0}', space=vmem, size = 0x400, scoped, tag = 'output window, operand 0, single buffered']
    #allocation4 [shape = 's32[1]{0}', space=sflag, size = 0x4, scoped, tag = 'scoped memory for tpu_custom_call.1']
    %13 = vsyncpa [#allocation4], 0
    // Predicated region
    $region2: #{tpu_custom_call.1} parent=1 // pred_check
      _
    $region3: #{tpu_custom_call.1} parent=1 // pred_check_branch
      %15 = sbr.rel (0) target = $region5
    $region4: #{tpu_custom_call.1} parent=1 // pred_region
      %s16 = scalar_lea.vmem %s0, 464
    $region5: #{tpu_custom_call.1} parent=1 // pred_fallthru
      _
    // Predicated region
    $region6: #{tpu_custom_call.1} parent=1 // pred_check
      _
    $region7: #{tpu_custom_call.1} parent=1 // pred_check_branch
      %18 = sbr.rel (0) target = $region9
    $region8: #{tpu_custom_call.1} parent=1 // pred_region
      _
    $region9: #{tpu_custom_call.1} parent=1 // pred_fallthru
      _
    // Predicated region
    $region10: #{tpu_custom_call.1} parent=1 // pred_check
      _
    $region11: #{tpu_custom_call.1} parent=1 // pred_check_branch
      %20 = sbr.rel (0) target = $region13
    $region12: #{tpu_custom_call.1} parent=1 // pred_region
      _
    $region13: #{tpu_custom_call.1} parent=1 // pred_fallthru
      _
    // Predicated region
    $region14: #{tpu_custom_call.1} parent=1 // pred_check
      _
    $region15: #{tpu_custom_call.1} parent=1 // pred_check_branch
      %22 = sbr.rel (0) target = $region17
    $region16: #{tpu_custom_call.1} parent=1 // pred_region
      _
    $region17: #{tpu_custom_call.1} parent=1 // pred_fallthru
      _
    // Predicated region
    $region18: #{tpu_custom_call.1} parent=1 // pred_check
      _
    $region19: #{tpu_custom_call.1} parent=1 // pred_check_branch
      %24 = sbr.rel (0) target = $region21
    $region20: #{tpu_custom_call.1} parent=1 // pred_region
      _
    $region21: #{tpu_custom_call.1} parent=1 // pred_fallthru
      _
    // Predicated region
    $region22: #{tpu_custom_call.1} parent=1 // pred_check
      _
    $region23: #{tpu_custom_call.1} parent=1 // pred_check_branch
      %26 = sbr.rel (0) target = $region25
    $region24: #{tpu_custom_call.1} parent=1 // pred_region
      _
    $region25: #{tpu_custom_call.1} parent=1 // pred_fallthru
      _
    // Predicated region
    $region26: #{tpu_custom_call.1} parent=1 // pred_check
      _
    $region27: #{tpu_custom_call.1} parent=1 // pred_check_branch
      %28 = sbr.rel (0) target = $region29
    $region28: #{tpu_custom_call.1} parent=1 // pred_region
      _
    $region29: #{tpu_custom_call.1} parent=1 // pred_fallthru
      _
    // Predicated region
    $region30: #{tpu_custom_call.1} parent=1 // pred_check
      _
    $region31: #{tpu_custom_call.1} parent=1 // pred_check_branch
      %30 = sbr.rel (0) target = $region33
    $region32: #{tpu_custom_call.1} parent=1 // pred_region
      _
    $region33: #{tpu_custom_call.1} parent=1 // pred_fallthru
      _
    %s31 = scalar_lea.vmem %s0, 464
    %s32 = scalar_lea.vmem %s0, 464
    %vm33 = vcmask 261120
    %34 = vst.msk [vmem:[#allocation2 + $0xe1] sm:$0xff] %vm33, 0.0
    %35 = vst.msk [vmem:[#allocation2 + $0xe9] sm:$0xff] %vm33, 0.0
    %36 = vst.msk [vmem:[#allocation2 + $0xf1] sm:$0xff] %vm33, 0.0
    %vm37 = vcmask 260096
    %38 = vst.msk [vmem:[#allocation2 + $0xf9] sm:$0x7f] %vm37, 0.0
    %39 = vst.msk [vmem:[#allocation2 + $0x1e1] sm:$0xff] %vm33, 0.0
    %40 = vst.msk [vmem:[#allocation2 + $0x1e9] sm:$0xff] %vm33, 0.0
    %41 = vst.msk [vmem:[#allocation2 + $0x1f1] sm:$0xff] %vm33, 0.0
    %42 = vst.msk [vmem:[#allocation2 + $0x1f9] sm:$0x7f] %vm37, 0.0
    %v43 = vld [vmem:[%s32] sm:$0xff]
    %v44 = vld [vmem:[%s32 + $0x8] sm:$0xff]
    %v45 = vld [vmem:[%s32 + $0x10] sm:$0xff]
    %v46 = vld [vmem:[%s32 + $0x18] sm:$0xff]
    %v47 = vld [vmem:[%s32 + $0x20] sm:$0xff]
    %v48 = vld [vmem:[%s32 + $0x28] sm:$0xff]
    %v49 = vld [vmem:[%s32 + $0x30] sm:$0xff]
    %v50 = vld [vmem:[%s32 + $0x38] sm:$0xff]
    %v51 = vld [vmem:[%s32 + $0x40] sm:$0xff]
    %v52 = vld [vmem:[%s32 + $0x48] sm:$0xff]
    %v53 = vld [vmem:[%s32 + $0x50] sm:$0xff]
    %v54 = vld [vmem:[%s32 + $0x58] sm:$0xff]
    %v55 = vld [vmem:[%s32 + $0x60] sm:$0xff]
    %v56 = vld [vmem:[%s32 + $0x68] sm:$0xff]
    %v57 = vld [vmem:[%s32 + $0x70] sm:$0xff]
    %v58 = vld [vmem:[%s32 + $0x78] sm:$0xff]
    %v59 = vld [vmem:[%s32 + $0x80] sm:$0xff]
    %v60 = vld [vmem:[%s32 + $0x88] sm:$0xff]
    %v61 = vld [vmem:[%s32 + $0x90] sm:$0xff]
    %v62 = vld [vmem:[%s32 + $0x98] sm:$0xff]
    %v63 = vld [vmem:[%s32 + $0xa0] sm:$0xff]
    %v64 = vld [vmem:[%s32 + $0xa8] sm:$0xff]
    %v65 = vld [vmem:[%s32 + $0xb0] sm:$0xff]
    %v66 = vld [vmem:[%s32 + $0xb8] sm:$0xff]
    %v67 = vld [vmem:[%s32 + $0xc0] sm:$0xff]
    %v68 = vld [vmem:[%s32 + $0xc8] sm:$0xff]
    %v69 = vld [vmem:[%s32 + $0xd0] sm:$0xff]
    %v70 = vld [vmem:[%s32 + $0xd8] sm:$0xff]
    %v71 = vld [vmem:[%s32 + $0xe0] sm:$0x1]
    %v72 = vld [vmem:[%s32 + $0xe8] sm:$0xff]
    %v73 = vld [vmem:[%s32 + $0xf0] sm:$0xff]
    %v74 = vld [vmem:[%s32 + $0xf8] sm:$0xff]
    %v75 = vld [vmem:[%s32 + $0x100] sm:$0xff]
    %v76 = vld [vmem:[%s32 + $0x108] sm:$0xff]
    %v77 = vld [vmem:[%s32 + $0x110] sm:$0xff]
    %v78 = vld [vmem:[%s32 + $0x118] sm:$0xff]
    %v79 = vld [vmem:[%s32 + $0x120] sm:$0xff]
    %v80 = vld [vmem:[%s32 + $0x128] sm:$0xff]
    %v81 = vld [vmem:[%s32 + $0x130] sm:$0xff]
    %v82 = vld [vmem:[%s32 + $0x138] sm:$0xff]
    %v83 = vld [vmem:[%s32 + $0x140] sm:$0xff]
    %v84 = vld [vmem:[%s32 + $0x148] sm:$0xff]
    %v85 = vld [vmem:[%s32 + $0x150] sm:$0xff]
    %v86 = vld [vmem:[%s32 + $0x158] sm:$0xff]
    %v87 = vld [vmem:[%s32 + $0x160] sm:$0xff]
    %v88 = vld [vmem:[%s32 + $0x168] sm:$0xff]
    %v89 = vld [vmem:[%s32 + $0x170] sm:$0xff]
    %v90 = vld [vmem:[%s32 + $0x178] sm:$0xff]
    %v91 = vld [vmem:[%s32 + $0x180] sm:$0xff]
    %v92 = vld [vmem:[%s32 + $0x188] sm:$0xff]
    %v93 = vld [vmem:[%s32 + $0x190] sm:$0xff]
    %v94 = vld [vmem:[%s32 + $0x198] sm:$0xff]
    %v95 = vld [vmem:[%s32 + $0x1a0] sm:$0xff]
    %v96 = vld [vmem:[%s32 + $0x1a8] sm:$0xff]
    %v97 = vld [vmem:[%s32 + $0x1b0] sm:$0xff]
    %v98 = vld [vmem:[%s32 + $0x1b8] sm:$0xff]
    %v99 = vld [vmem:[%s32 + $0x1c0] sm:$0xff]
    %v100 = vld [vmem:[%s32 + $0x1c8] sm:$0x1]
    %101 = vst.msk [vmem:[#allocation2] sm:$0xff] %vm33, %v43
    %102 = vst.msk [vmem:[#allocation2 + $0x8] sm:$0xff] %vm33, %v44
    %103 = vst.msk [vmem:[#allocation2 + $0x10] sm:$0xff] %vm33, %v45
    %104 = vst.msk [vmem:[#allocation2 + $0x18] sm:$0xff] %vm33, %v46
    %105 = vst.msk [vmem:[#allocation2 + $0x20] sm:$0xff] %vm33, %v47
    %106 = vst.msk [vmem:[#allocation2 + $0x28] sm:$0xff] %vm33, %v48
    %107 = vst.msk [vmem:[#allocation2 + $0x30] sm:$0xff] %vm33, %v49
    %108 = vst.msk [vmem:[#allocation2 + $0x38] sm:$0xff] %vm33, %v50
    %109 = vst.msk [vmem:[#allocation2 + $0x40] sm:$0xff] %vm33, %v51
    %110 = vst.msk [vmem:[#allocation2 + $0x48] sm:$0xff] %vm33, %v52
    %111 = vst.msk [vmem:[#allocation2 + $0x50] sm:$0xff] %vm33, %v53
    %112 = vst.msk [vmem:[#allocation2 + $0x58] sm:$0xff] %vm33, %v54
    %113 = vst.msk [vmem:[#allocation2 + $0x60] sm:$0xff] %vm33, %v55
    %114 = vst.msk [vmem:[#allocation2 + $0x68] sm:$0xff] %vm33, %v56
    %115 = vst.msk [vmem:[#allocation2 + $0x70] sm:$0xff] %vm33, %v57
    %116 = vst.msk [vmem:[#allocation2 + $0x78] sm:$0xff] %vm33, %v58
    %117 = vst.msk [vmem:[#allocation2 + $0x80] sm:$0xff] %vm33, %v59
    %118 = vst.msk [vmem:[#allocation2 + $0x88] sm:$0xff] %vm33, %v60
    %119 = vst.msk [vmem:[#allocation2 + $0x90] sm:$0xff] %vm33, %v61
    %120 = vst.msk [vmem:[#allocation2 + $0x98] sm:$0xff] %vm33, %v62
    %121 = vst.msk [vmem:[#allocation2 + $0xa0] sm:$0xff] %vm33, %v63
    %122 = vst.msk [vmem:[#allocation2 + $0xa8] sm:$0xff] %vm33, %v64
    %123 = vst.msk [vmem:[#allocation2 + $0xb0] sm:$0xff] %vm33, %v65
    %124 = vst.msk [vmem:[#allocation2 + $0xb8] sm:$0xff] %vm33, %v66
    %125 = vst.msk [vmem:[#allocation2 + $0xc0] sm:$0xff] %vm33, %v67
    %126 = vst.msk [vmem:[#allocation2 + $0xc8] sm:$0xff] %vm33, %v68
    %127 = vst.msk [vmem:[#allocation2 + $0xd0] sm:$0xff] %vm33, %v69
    %128 = vst.msk [vmem:[#allocation2 + $0xd8] sm:$0xff] %vm33, %v70
    %vm129 = vcmask 253952
    %130 = vst.msk [vmem:[#allocation2 + $0xe0] sm:$0x1] %vm129, %v71
    %131 = vst.msk [vmem:[#allocation2 + $0x100] sm:$0xff] %vm33, %v72
    %132 = vst.msk [vmem:[#allocation2 + $0x108] sm:$0xff] %vm33, %v73
    %133 = vst.msk [vmem:[#allocation2 + $0x110] sm:$0xff] %vm33, %v74
    %134 = vst.msk [vmem:[#allocation2 + $0x118] sm:$0xff] %vm33, %v75
    %135 = vst.msk [vmem:[#allocation2 + $0x120] sm:$0xff] %vm33, %v76
    %136 = vst.msk [vmem:[#allocation2 + $0x128] sm:$0xff] %vm33, %v77
    %137 = vst.msk [vmem:[#allocation2 + $0x130] sm:$0xff] %vm33, %v78
    %138 = vst.msk [vmem:[#allocation2 + $0x138] sm:$0xff] %vm33, %v79
    %139 = vst.msk [vmem:[#allocation2 + $0x140] sm:$0xff] %vm33, %v80
    %140 = vst.msk [vmem:[#allocation2 + $0x148] sm:$0xff] %vm33, %v81
    %141 = vst.msk [vmem:[#allocation2 + $0x150] sm:$0xff] %vm33, %v82
    %142 = vst.msk [vmem:[#allocation2 + $0x158] sm:$0xff] %vm33, %v83
    %143 = vst.msk [vmem:[#allocation2 + $0x160] sm:$0xff] %vm33, %v84
    %144 = vst.msk [vmem:[#allocation2 + $0x168] sm:$0xff] %vm33, %v85
    %145 = vst.msk [vmem:[#allocation2 + $0x170] sm:$0xff] %vm33, %v86
    %146 = vst.msk [vmem:[#allocation2 + $0x178] sm:$0xff] %vm33, %v87
    %147 = vst.msk [vmem:[#allocation2 + $0x180] sm:$0xff] %vm33, %v88
    %148 = vst.msk [vmem:[#allocation2 + $0x188] sm:$0xff] %vm33, %v89
    %149 = vst.msk [vmem:[#allocation2 + $0x190] sm:$0xff] %vm33, %v90
    %150 = vst.msk [vmem:[#allocation2 + $0x198] sm:$0xff] %vm33, %v91
    %151 = vst.msk [vmem:[#allocation2 + $0x1a0] sm:$0xff] %vm33, %v92
    %152 = vst.msk [vmem:[#allocation2 + $0x1a8] sm:$0xff] %vm33, %v93
    %153 = vst.msk [vmem:[#allocation2 + $0x1b0] sm:$0xff] %vm33, %v94
    %154 = vst.msk [vmem:[#allocation2 + $0x1b8] sm:$0xff] %vm33, %v95
    %155 = vst.msk [vmem:[#allocation2 + $0x1c0] sm:$0xff] %vm33, %v96
    %156 = vst.msk [vmem:[#allocation2 + $0x1c8] sm:$0xff] %vm33, %v97
    %157 = vst.msk [vmem:[#allocation2 + $0x1d0] sm:$0xff] %vm33, %v98
    %158 = vst.msk [vmem:[#allocation2 + $0x1d8] sm:$0xff] %vm33, %v99
    %159 = vst.msk [vmem:[#allocation2 + $0x1e0] sm:$0x1] %vm129, %v100
    %v160 = vld [vmem:[#allocation2] sm:$0xff]
    %v161 = vld [vmem:[#allocation2 + $0x8] sm:$0xff]
    %v162 = vld [vmem:[#allocation2 + $0x10] sm:$0xff]
    %v163 = vld [vmem:[#allocation2 + $0x18] sm:$0xff]
    %v164 = vld [vmem:[#allocation2 + $0x20] sm:$0xff]
    %v165 = vld [vmem:[#allocation2 + $0x28] sm:$0xff]
    %v166 = vld [vmem:[#allocation2 + $0x30] sm:$0xff]
    %v167 = vld [vmem:[#allocation2 + $0x38] sm:$0xff]
    %v168 = vld [vmem:[#allocation2 + $0x40] sm:$0xff]
    %v169 = vld [vmem:[#allocation2 + $0x48] sm:$0xff]
    %v170 = vld [vmem:[#allocation2 + $0x50] sm:$0xff]
    %v171 = vld [vmem:[#allocation2 + $0x58] sm:$0xff]
    %v172 = vld [vmem:[#allocation2 + $0x60] sm:$0xff]
    %v173 = vld [vmem:[#allocation2 + $0x68] sm:$0xff]
    %v174 = vld [vmem:[#allocation2 + $0x70] sm:$0xff]
    %v175 = vld [vmem:[#allocation2 + $0x78] sm:$0xff]
    %v176 = vld [vmem:[#allocation2 + $0x80] sm:$0xff]
    %v177 = vld [vmem:[#allocation2 + $0x88] sm:$0xff]
    %v178 = vld [vmem:[#allocation2 + $0x90] sm:$0xff]
    %v179 = vld [vmem:[#allocation2 + $0x98] sm:$0xff]
    %v180 = vld [vmem:[#allocation2 + $0xa0] sm:$0xff]
    %v181 = vld [vmem:[#allocation2 + $0xa8] sm:$0xff]
    %v182 = vld [vmem:[#allocation2 + $0xb0] sm:$0xff]
    %v183 = vld [vmem:[#allocation2 + $0xb8] sm:$0xff]
    %v184 = vld [vmem:[#allocation2 + $0xc0] sm:$0xff]
    %v185 = vld [vmem:[#allocation2 + $0xc8] sm:$0xff]
    %v186 = vld [vmem:[#allocation2 + $0xd0] sm:$0xff]
    %v187 = vld [vmem:[#allocation2 + $0xd8] sm:$0xff]
    %v188 = vld [vmem:[#allocation2 + $0xe0] sm:$0xff]
    %v189 = vld [vmem:[#allocation2 + $0xe8] sm:$0xff]
    %v190 = vld [vmem:[#allocation2 + $0xf0] sm:$0xff]
    %v191 = vld [vmem:[#allocation2 + $0xf8] sm:$0xff]
    %v192 = vld [vmem:[#allocation2 + $0x100] sm:$0xff]
    %v193 = vld [vmem:[#allocation2 + $0x108] sm:$0xff]
    %v194 = vld [vmem:[#allocation2 + $0x110] sm:$0xff]
    %v195 = vld [vmem:[#allocation2 + $0x118] sm:$0xff]
    %v196 = vld [vmem:[#allocation2 + $0x120] sm:$0xff]
    %v197 = vld [vmem:[#allocation2 + $0x128] sm:$0xff]
    %v198 = vld [vmem:[#allocation2 + $0x130] sm:$0xff]
    %v199 = vld [vmem:[#allocation2 + $0x138] sm:$0xff]
    %v200 = vld [vmem:[#allocation2 + $0x140] sm:$0xff]
    %v201 = vld [vmem:[#allocation2 + $0x148] sm:$0xff]
    %v202 = vld [vmem:[#allocation2 + $0x150] sm:$0xff]
    %v203 = vld [vmem:[#allocation2 + $0x158] sm:$0xff]
    %v204 = vld [vmem:[#allocation2 + $0x160] sm:$0xff]
    %v205 = vld [vmem:[#allocation2 + $0x168] sm:$0xff]
    %v206 = vld [vmem:[#allocation2 + $0x170] sm:$0xff]
    %v207 = vld [vmem:[#allocation2 + $0x178] sm:$0xff]
    %v208 = vld [vmem:[#allocation2 + $0x180] sm:$0xff]
    %v209 = vld [vmem:[#allocation2 + $0x188] sm:$0xff]
    %v210 = vld [vmem:[#allocation2 + $0x190] sm:$0xff]
    %v211 = vld [vmem:[#allocation2 + $0x198] sm:$0xff]
    %v212 = vld [vmem:[#allocation2 + $0x1a0] sm:$0xff]
    %v213 = vld [vmem:[#allocation2 + $0x1a8] sm:$0xff]
    %v214 = vld [vmem:[#allocation2 + $0x1b0] sm:$0xff]
    %v215 = vld [vmem:[#allocation2 + $0x1b8] sm:$0xff]
    %v216 = vld [vmem:[#allocation2 + $0x1c0] sm:$0xff]
    %v217 = vld [vmem:[#allocation2 + $0x1c8] sm:$0xff]
    %v218 = vld [vmem:[#allocation2 + $0x1d0] sm:$0xff]
    %v219 = vld [vmem:[#allocation2 + $0x1d8] sm:$0xff]
    %v220 = vld [vmem:[#allocation2 + $0x1e0] sm:$0xff]
    %v221 = vld [vmem:[#allocation2 + $0x1e8] sm:$0xff]
    %v222 = vld [vmem:[#allocation2 + $0x1f0] sm:$0xff]
    %v223 = vld [vmem:[#allocation2 + $0x1f8] sm:$0xff]
    %v224 = vld [vmem:[%s1] sm:$0xff]
    %v225 = vld [vmem:[%s1 + $0x8] sm:$0xff]
    %v226 = vld [vmem:[%s1 + $0x10] sm:$0xff]
    %v227 = vld [vmem:[%s1 + $0x18] sm:$0xff]
    %v228 = vld [vmem:[%s2] sm:$0x1]
    %v230 = vperm.slane %v228, 0
    %v233 = vsel %vm33, %v160, 0
    %v236 = vsel %vm33, %v161, 0
    %v239 = vsel %vm33, %v162, 0
    %v242 = vsel %vm33, %v163, 0
    %v245 = vsel %vm33, %v164, 0
    %v248 = vsel %vm33, %v165, 0
    %v251 = vsel %vm33, %v166, 0
    %v254 = vsel %vm33, %v167, 0
    %v257 = vsel %vm33, %v168, 0
    %v260 = vsel %vm33, %v169, 0
    %v263 = vsel %vm33, %v170, 0
    %v266 = vsel %vm33, %v171, 0
    %v269 = vsel %vm33, %v172, 0
    %v272 = vsel %vm33, %v173, 0
    %v275 = vsel %vm33, %v174, 0
    %v278 = vsel %vm33, %v175, 0
    %v281 = vsel %vm33, %v176, 0
    %v284 = vsel %vm33, %v177, 0
    %v287 = vsel %vm33, %v178, 0
    %v290 = vsel %vm33, %v179, 0
    %v293 = vsel %vm33, %v180, 0
    %v296 = vsel %vm33, %v181, 0
    %v299 = vsel %vm33, %v182, 0
    %v302 = vsel %vm33, %v183, 0
    %v305 = vsel %vm33, %v184, 0
    %v308 = vsel %vm33, %v185, 0
    %v311 = vsel %vm33, %v186, 0
    %v314 = vsel %vm33, %v187, 0
    %v317 = vsel %vm33, %v188, 0
    %v320 = vsel %vm33, %v189, 0
    %v323 = vsel %vm33, %v190, 0
    %v326 = vsel %vm33, %v191, 0
    %v329 = vsel %vm33, %v192, 0
    %v332 = vsel %vm33, %v193, 0
    %v335 = vsel %vm33, %v194, 0
    %v338 = vsel %vm33, %v195, 0
    %v341 = vsel %vm33, %v196, 0
    %v344 = vsel %vm33, %v197, 0
    %v347 = vsel %vm33, %v198, 0
    %v350 = vsel %vm33, %v199, 0
    %v353 = vsel %vm33, %v200, 0
    %v356 = vsel %vm33, %v201, 0
    %v359 = vsel %vm33, %v202, 0
    %v362 = vsel %vm33, %v203, 0
    %v365 = vsel %vm33, %v204, 0
    %v368 = vsel %vm33, %v205, 0
    %v371 = vsel %vm33, %v206, 0
    %v374 = vsel %vm33, %v207, 0
    %v377 = vsel %vm33, %v208, 0
    %v380 = vsel %vm33, %v209, 0
    %v383 = vsel %vm33, %v210, 0
    %v386 = vsel %vm33, %v211, 0
    %v389 = vsel %vm33, %v212, 0
    %v392 = vsel %vm33, %v213, 0
    %v395 = vsel %vm33, %v214, 0
    %v398 = vsel %vm33, %v215, 0
    %v401 = vsel %vm33, %v216, 0
    %v404 = vsel %vm33, %v217, 0
    %v407 = vsel %vm33, %v218, 0
    %v410 = vsel %vm33, %v219, 0
    %v413 = vsel %vm33, %v220, 0
    %v416 = vsel %vm33, %v221, 0
    %v419 = vsel %vm33, %v222, 0
    %v422 = vsel %vm33, %v223, 0
    %424 = vmatpush.msra.mxu0 0.0
    %425 = vmatpush.msra.mxu0 0.0
    %426 = vmatpush.msra.mxu0 0.0
    %427 = vmatpush.msra.mxu0 0.0
    %428 = vmatpush.msra.mxu0 0.0
    %429 = vmatpush.msra.mxu0 0.0
    %430 = vmatpush.msra.mxu0 0.0
    %431 = vmatpush.msra.mxu0 0.0
    %432 = vmatpush.msra.mxu0 0.0
    %433 = vmatpush.msra.mxu0 0.0
    %434 = vmatpush.msra.mxu0 0.0
    %435 = vmatpush.msra.mxu0 0.0
    %436 = vmatpush.msra.mxu0 %v227
    %437 = vmatpush.msra.mxu0 %v226
    %438 = vmatpush.msra.mxu0 %v225
    %439 = vmatpush.msra.mxu0 %v224
    %440 = vmatmul.f32.gmra.mxu0 %v233
    %v441 = vpop.f32.mrf.mxu0
    %v442 = vadd.f32 %v230, %v441
    %443 = vmatmul.f32.gmra.mxu0 %v236
    %v444 = vpop.f32.mrf.mxu0
    %v445 = vadd.f32 %v230, %v444
    %446 = vmatmul.f32.gmra.mxu0 %v239
    %v447 = vpop.f32.mrf.mxu0
    %v448 = vadd.f32 %v230, %v447
    %449 = vmatmul.f32.gmra.mxu0 %v242
    %v450 = vpop.f32.mrf.mxu0
    %v451 = vadd.f32 %v230, %v450
    %452 = vmatmul.f32.gmra.mxu0 %v245
    %v453 = vpop.f32.mrf.mxu0
    %v454 = vadd.f32 %v230, %v453
    %455 = vmatmul.f32.gmra.mxu0 %v248
    %v456 = vpop.f32.mrf.mxu0
    %v457 = vadd.f32 %v230, %v456
    %458 = vmatmul.f32.gmra.mxu0 %v251
    %v459 = vpop.f32.mrf.mxu0
    %v460 = vadd.f32 %v230, %v459
    %461 = vmatmul.f32.gmra.mxu0 %v254
    %v462 = vpop.f32.mrf.mxu0
    %v463 = vadd.f32 %v230, %v462
    %464 = vmatmul.f32.gmra.mxu0 %v257
    %v465 = vpop.f32.mrf.mxu0
    %v466 = vadd.f32 %v230, %v465
    %467 = vmatmul.f32.gmra.mxu0 %v260
    %v468 = vpop.f32.mrf.mxu0
    %v469 = vadd.f32 %v230, %v468
    %470 = vmatmul.f32.gmra.mxu0 %v263
    %v471 = vpop.f32.mrf.mxu0
    %v472 = vadd.f32 %v230, %v471
    %473 = vmatmul.f32.gmra.mxu0 %v266
    %v474 = vpop.f32.mrf.mxu0
    %v475 = vadd.f32 %v230, %v474
    %476 = vmatmul.f32.gmra.mxu0 %v269
    %v477 = vpop.f32.mrf.mxu0
    %v478 = vadd.f32 %v230, %v477
    %479 = vmatmul.f32.gmra.mxu0 %v272
    %v480 = vpop.f32.mrf.mxu0
    %v481 = vadd.f32 %v230, %v480
    %482 = vmatmul.f32.gmra.mxu0 %v275
    %v483 = vpop.f32.mrf.mxu0
    %v484 = vadd.f32 %v230, %v483
    %485 = vmatmul.f32.gmra.mxu0 %v278
    %v486 = vpop.f32.mrf.mxu0
    %v487 = vadd.f32 %v230, %v486
    %488 = vmatmul.f32.gmra.mxu0 %v281
    %v489 = vpop.f32.mrf.mxu0
    %v490 = vadd.f32 %v230, %v489
    %491 = vmatmul.f32.gmra.mxu0 %v284
    %v492 = vpop.f32.mrf.mxu0
    %v493 = vadd.f32 %v230, %v492
    %494 = vmatmul.f32.gmra.mxu0 %v287
    %v495 = vpop.f32.mrf.mxu0
    %v496 = vadd.f32 %v230, %v495
    %497 = vmatmul.f32.gmra.mxu0 %v290
    %v498 = vpop.f32.mrf.mxu0
    %v499 = vadd.f32 %v230, %v498
    %500 = vmatmul.f32.gmra.mxu0 %v293
    %v501 = vpop.f32.mrf.mxu0
    %v502 = vadd.f32 %v230, %v501
    %503 = vmatmul.f32.gmra.mxu0 %v296
    %v504 = vpop.f32.mrf.mxu0
    %v505 = vadd.f32 %v230, %v504
    %506 = vmatmul.f32.gmra.mxu0 %v299
    %v507 = vpop.f32.mrf.mxu0
    %v508 = vadd.f32 %v230, %v507
    %509 = vmatmul.f32.gmra.mxu0 %v302
    %v510 = vpop.f32.mrf.mxu0
    %v511 = vadd.f32 %v230, %v510
    %512 = vmatmul.f32.gmra.mxu0 %v305
    %v513 = vpop.f32.mrf.mxu0
    %v514 = vadd.f32 %v230, %v513
    %515 = vmatmul.f32.gmra.mxu0 %v308
    %v516 = vpop.f32.mrf.mxu0
    %v517 = vadd.f32 %v230, %v516
    %518 = vmatmul.f32.gmra.mxu0 %v311
    %v519 = vpop.f32.mrf.mxu0
    %v520 = vadd.f32 %v230, %v519
    %521 = vmatmul.f32.gmra.mxu0 %v314
    %v522 = vpop.f32.mrf.mxu0
    %v523 = vadd.f32 %v230, %v522
    %524 = vmatmul.f32.gmra.mxu0 %v317
    %v525 = vpop.f32.mrf.mxu0
    %v526 = vadd.f32 %v230, %v525
    %527 = vmatmul.f32.gmra.mxu0 %v320
    %v528 = vpop.f32.mrf.mxu0
    %v529 = vadd.f32 %v230, %v528
    %530 = vmatmul.f32.gmra.mxu0 %v323
    %v531 = vpop.f32.mrf.mxu0
    %v532 = vadd.f32 %v230, %v531
    %533 = vmatmul.f32.gmra.mxu0 %v326
    %v534 = vpop.f32.mrf.mxu0
    %v535 = vadd.f32 %v230, %v534
    %536 = vmatmul.f32.gmra.mxu0 %v329
    %v537 = vpop.f32.mrf.mxu0
    %v538 = vadd.f32 %v230, %v537
    %539 = vmatmul.f32.gmra.mxu0 %v332
    %v540 = vpop.f32.mrf.mxu0
    %v541 = vadd.f32 %v230, %v540
    %542 = vmatmul.f32.gmra.mxu0 %v335
    %v543 = vpop.f32.mrf.mxu0
    %v544 = vadd.f32 %v230, %v543
    %545 = vmatmul.f32.gmra.mxu0 %v338
    %v546 = vpop.f32.mrf.mxu0
    %v547 = vadd.f32 %v230, %v546
    %548 = vmatmul.f32.gmra.mxu0 %v341
    %v549 = vpop.f32.mrf.mxu0
    %v550 = vadd.f32 %v230, %v549
    %551 = vmatmul.f32.gmra.mxu0 %v344
    %v552 = vpop.f32.mrf.mxu0
    %v553 = vadd.f32 %v230, %v552
    %554 = vmatmul.f32.gmra.mxu0 %v347
    %v555 = vpop.f32.mrf.mxu0
    %v556 = vadd.f32 %v230, %v555
    %557 = vmatmul.f32.gmra.mxu0 %v350
    %v558 = vpop.f32.mrf.mxu0
    %v559 = vadd.f32 %v230, %v558
    %560 = vmatmul.f32.gmra.mxu0 %v353
    %v561 = vpop.f32.mrf.mxu0
    %v562 = vadd.f32 %v230, %v561
    %563 = vmatmul.f32.gmra.mxu0 %v356
    %v564 = vpop.f32.mrf.mxu0
    %v565 = vadd.f32 %v230, %v564
    %566 = vmatmul.f32.gmra.mxu0 %v359
    %v567 = vpop.f32.mrf.mxu0
    %v568 = vadd.f32 %v230, %v567
    %569 = vmatmul.f32.gmra.mxu0 %v362
    %v570 = vpop.f32.mrf.mxu0
    %v571 = vadd.f32 %v230, %v570
    %572 = vmatmul.f32.gmra.mxu0 %v365
    %v573 = vpop.f32.mrf.mxu0
    %v574 = vadd.f32 %v230, %v573
    %575 = vmatmul.f32.gmra.mxu0 %v368
    %v576 = vpop.f32.mrf.mxu0
    %v577 = vadd.f32 %v230, %v576
    %578 = vmatmul.f32.gmra.mxu0 %v371
    %v579 = vpop.f32.mrf.mxu0
    %v580 = vadd.f32 %v230, %v579
    %581 = vmatmul.f32.gmra.mxu0 %v374
    %v582 = vpop.f32.mrf.mxu0
    %v583 = vadd.f32 %v230, %v582
    %584 = vmatmul.f32.gmra.mxu0 %v377
    %v585 = vpop.f32.mrf.mxu0
    %v586 = vadd.f32 %v230, %v585
    %587 = vmatmul.f32.gmra.mxu0 %v380
    %v588 = vpop.f32.mrf.mxu0
    %v589 = vadd.f32 %v230, %v588
    %590 = vmatmul.f32.gmra.mxu0 %v383
    %v591 = vpop.f32.mrf.mxu0
    %v592 = vadd.f32 %v230, %v591
    %593 = vmatmul.f32.gmra.mxu0 %v386
    %v594 = vpop.f32.mrf.mxu0
    %v595 = vadd.f32 %v230, %v594
    %596 = vmatmul.f32.gmra.mxu0 %v389
    %v597 = vpop.f32.mrf.mxu0
    %v598 = vadd.f32 %v230, %v597
    %599 = vmatmul.f32.gmra.mxu0 %v392
    %v600 = vpop.f32.mrf.mxu0
    %v601 = vadd.f32 %v230, %v600
    %602 = vmatmul.f32.gmra.mxu0 %v395
    %v603 = vpop.f32.mrf.mxu0
    %v604 = vadd.f32 %v230, %v603
    %605 = vmatmul.f32.gmra.mxu0 %v398
    %v606 = vpop.f32.mrf.mxu0
    %v607 = vadd.f32 %v230, %v606
    %608 = vmatmul.f32.gmra.mxu0 %v401
    %v609 = vpop.f32.mrf.mxu0
    %v610 = vadd.f32 %v230, %v609
    %611 = vmatmul.f32.gmra.mxu0 %v404
    %v612 = vpop.f32.mrf.mxu0
    %v613 = vadd.f32 %v230, %v612
    %614 = vmatmul.f32.gmra.mxu0 %v407
    %v615 = vpop.f32.mrf.mxu0
    %v616 = vadd.f32 %v230, %v615
    %617 = vmatmul.f32.gmra.mxu0 %v410
    %v618 = vpop.f32.mrf.mxu0
    %v619 = vadd.f32 %v230, %v618
    %620 = vmatmul.f32.gmra.mxu0 %v413
    %v621 = vpop.f32.mrf.mxu0
    %v622 = vadd.f32 %v230, %v621
    %623 = vmatmul.f32.gmra.mxu0 %v416
    %v624 = vpop.f32.mrf.mxu0
    %v625 = vadd.f32 %v230, %v624
    %626 = vmatmul.f32.gmra.mxu0 %v419
    %v627 = vpop.f32.mrf.mxu0
    %v628 = vadd.f32 %v230, %v627
    %629 = vmatmul.f32.gmra.mxu0 %v422
    %v630 = vpop.f32.mrf.mxu0
    %v631 = vadd.f32 %v230, %v630
    %632 = vdwg.mxu0
    %v633 = vmax.f32 %v442, 0.0
    %v634 = vmax.f32 %v445, 0.0
    %v635 = vmax.f32 %v448, 0.0
    %v636 = vmax.f32 %v451, 0.0
    %v637 = vmax.f32 %v454, 0.0
    %v638 = vmax.f32 %v457, 0.0
    %v639 = vmax.f32 %v460, 0.0
    %v640 = vmax.f32 %v463, 0.0
    %v641 = vmax.f32 %v466, 0.0
    %v642 = vmax.f32 %v469, 0.0
    %v643 = vmax.f32 %v472, 0.0
    %v644 = vmax.f32 %v475, 0.0
    %v645 = vmax.f32 %v478, 0.0
    %v646 = vmax.f32 %v481, 0.0
    %v647 = vmax.f32 %v484, 0.0
    %v648 = vmax.f32 %v487, 0.0
    %v649 = vmax.f32 %v490, 0.0
    %v650 = vmax.f32 %v493, 0.0
    %v651 = vmax.f32 %v496, 0.0
    %v652 = vmax.f32 %v499, 0.0
    %v653 = vmax.f32 %v502, 0.0
    %v654 = vmax.f32 %v505, 0.0
    %v655 = vmax.f32 %v508, 0.0
    %v656 = vmax.f32 %v511, 0.0
    %v657 = vmax.f32 %v514, 0.0
    %v658 = vmax.f32 %v517, 0.0
    %v659 = vmax.f32 %v520, 0.0
    %v660 = vmax.f32 %v523, 0.0
    %v661 = vmax.f32 %v526, 0.0
    %v662 = vmax.f32 %v529, 0.0
    %v663 = vmax.f32 %v532, 0.0
    %v664 = vmax.f32 %v535, 0.0
    %v665 = vmax.f32 %v538, 0.0
    %v666 = vmax.f32 %v541, 0.0
    %v667 = vmax.f32 %v544, 0.0
    %v668 = vmax.f32 %v547, 0.0
    %v669 = vmax.f32 %v550, 0.0
    %v670 = vmax.f32 %v553, 0.0
    %v671 = vmax.f32 %v556, 0.0
    %v672 = vmax.f32 %v559, 0.0
    %v673 = vmax.f32 %v562, 0.0
    %v674 = vmax.f32 %v565, 0.0
    %v675 = vmax.f32 %v568, 0.0
    %v676 = vmax.f32 %v571, 0.0
    %v677 = vmax.f32 %v574, 0.0
    %v678 = vmax.f32 %v577, 0.0
    %v679 = vmax.f32 %v580, 0.0
    %v680 = vmax.f32 %v583, 0.0
    %v681 = vmax.f32 %v586, 0.0
    %v682 = vmax.f32 %v589, 0.0
    %v683 = vmax.f32 %v592, 0.0
    %v684 = vmax.f32 %v595, 0.0
    %v685 = vmax.f32 %v598, 0.0
    %v686 = vmax.f32 %v601, 0.0
    %v687 = vmax.f32 %v604, 0.0
    %v688 = vmax.f32 %v607, 0.0
    %v689 = vmax.f32 %v610, 0.0
    %v690 = vmax.f32 %v613, 0.0
    %v691 = vmax.f32 %v616, 0.0
    %v692 = vmax.f32 %v619, 0.0
    %v693 = vmax.f32 %v622, 0.0
    %v694 = vmax.f32 %v625, 0.0
    %v695 = vmax.f32 %v628, 0.0
    %v696 = vmax.f32 %v631, 0.0
    %v697 = vld [vmem:[%s3] sm:$0xff]
    %v698 = vld [vmem:[%s3 + $0x8] sm:$0xff]
    %v699 = vld [vmem:[%s3 + $0x10] sm:$0xff]
    %v700 = vld [vmem:[%s3 + $0x18] sm:$0xff]
    %v701 = vld [vmem:[%s3 + $0x20] sm:$0xff]
    %v702 = vld [vmem:[%s3 + $0x28] sm:$0xff]
    %v703 = vld [vmem:[%s3 + $0x30] sm:$0xff]
    %v704 = vld [vmem:[%s3 + $0x38] sm:$0xff]
    %v705 = vld [vmem:[%s4] sm:$0x1]
    %v707 = vperm.slane %v705, 0
    %vm709 = vcmask 523264
    %v711 = vsel %vm709, %v633, 0
    %v714 = vsel %vm709, %v634, 0
    %v717 = vsel %vm709, %v635, 0
    %v720 = vsel %vm709, %v636, 0
    %v723 = vsel %vm709, %v637, 0
    %v726 = vsel %vm709, %v638, 0
    %v729 = vsel %vm709, %v639, 0
    %v732 = vsel %vm709, %v640, 0
    %v735 = vsel %vm709, %v641, 0
    %v738 = vsel %vm709, %v642, 0
    %v741 = vsel %vm709, %v643, 0
    %v744 = vsel %vm709, %v644, 0
    %v747 = vsel %vm709, %v645, 0
    %v750 = vsel %vm709, %v646, 0
    %v753 = vsel %vm709, %v647, 0
    %v756 = vsel %vm709, %v648, 0
    %v759 = vsel %vm709, %v649, 0
    %v762 = vsel %vm709, %v650, 0
    %v765 = vsel %vm709, %v651, 0
    %v768 = vsel %vm709, %v652, 0
    %v771 = vsel %vm709, %v653, 0
    %v774 = vsel %vm709, %v654, 0
    %v777 = vsel %vm709, %v655, 0
    %v780 = vsel %vm709, %v656, 0
    %v783 = vsel %vm709, %v657, 0
    %v786 = vsel %vm709, %v658, 0
    %v789 = vsel %vm709, %v659, 0
    %v792 = vsel %vm709, %v660, 0
    %v795 = vsel %vm709, %v661, 0
    %v798 = vsel %vm709, %v662, 0
    %v801 = vsel %vm709, %v663, 0
    %v804 = vsel %vm709, %v664, 0
    %v807 = vsel %vm709, %v665, 0
    %v810 = vsel %vm709, %v666, 0
    %v813 = vsel %vm709, %v667, 0
    %v816 = vsel %vm709, %v668, 0
    %v819 = vsel %vm709, %v669, 0
    %v822 = vsel %vm709, %v670, 0
    %v825 = vsel %vm709, %v671, 0
    %v828 = vsel %vm709, %v672, 0
    %v831 = vsel %vm709, %v673, 0
    %v834 = vsel %vm709, %v674, 0
    %v837 = vsel %vm709, %v675, 0
    %v840 = vsel %vm709, %v676, 0
    %v843 = vsel %vm709, %v677, 0
    %v846 = vsel %vm709, %v678, 0
    %v849 = vsel %vm709, %v679, 0
    %v852 = vsel %vm709, %v680, 0
    %v855 = vsel %vm709, %v681, 0
    %v858 = vsel %vm709, %v682, 0
    %v861 = vsel %vm709, %v683, 0
    %v864 = vsel %vm709, %v684, 0
    %v867 = vsel %vm709, %v685, 0
    %v870 = vsel %vm709, %v686, 0
    %v873 = vsel %vm709, %v687, 0
    %v876 = vsel %vm709, %v688, 0
    %v879 = vsel %vm709, %v689, 0
    %v882 = vsel %vm709, %v690, 0
    %v885 = vsel %vm709, %v691, 0
    %v888 = vsel %vm709, %v692, 0
    %v891 = vsel %vm709, %v693, 0
    %v894 = vsel %vm709, %v694, 0
    %v897 = vsel %vm709, %v695, 0
    %v900 = vsel %vm709, %v696, 0
    %902 = vmatpush.msra.mxu0 0.0
    %903 = vmatpush.msra.mxu0 0.0
    %904 = vmatpush.msra.mxu0 0.0
    %905 = vmatpush.msra.mxu0 0.0
    %906 = vmatpush.msra.mxu0 0.0
    %907 = vmatpush.msra.mxu0 0.0
    %908 = vmatpush.msra.mxu0 0.0
    %909 = vmatpush.msra.mxu0 0.0
    %910 = vmatpush.msra.mxu0 %v704
    %911 = vmatpush.msra.mxu0 %v703
    %912 = vmatpush.msra.mxu0 %v702
    %913 = vmatpush.msra.mxu0 %v701
    %914 = vmatpush.msra.mxu0 %v700
    %915 = vmatpush.msra.mxu0 %v699
    %916 = vmatpush.msra.mxu0 %v698
    %917 = vmatpush.msra.mxu0 %v697
    %918 = vmatmul.f32.gmra.mxu0 %v711
    %v919 = vpop.f32.mrf.mxu0
    %v920 = vadd.f32 %v707, %v919
    %921 = vmatmul.f32.gmra.mxu0 %v714
    %v922 = vpop.f32.mrf.mxu0
    %v923 = vadd.f32 %v707, %v922
    %924 = vmatmul.f32.gmra.mxu0 %v717
    %v925 = vpop.f32.mrf.mxu0
    %v926 = vadd.f32 %v707, %v925
    %927 = vmatmul.f32.gmra.mxu0 %v720
    %v928 = vpop.f32.mrf.mxu0
    %v929 = vadd.f32 %v707, %v928
    %930 = vmatmul.f32.gmra.mxu0 %v723
    %v931 = vpop.f32.mrf.mxu0
    %v932 = vadd.f32 %v707, %v931
    %933 = vmatmul.f32.gmra.mxu0 %v726
    %v934 = vpop.f32.mrf.mxu0
    %v935 = vadd.f32 %v707, %v934
    %936 = vmatmul.f32.gmra.mxu0 %v729
    %v937 = vpop.f32.mrf.mxu0
    %v938 = vadd.f32 %v707, %v937
    %939 = vmatmul.f32.gmra.mxu0 %v732
    %v940 = vpop.f32.mrf.mxu0
    %v941 = vadd.f32 %v707, %v940
    %942 = vmatmul.f32.gmra.mxu0 %v735
    %v943 = vpop.f32.mrf.mxu0
    %v944 = vadd.f32 %v707, %v943
    %945 = vmatmul.f32.gmra.mxu0 %v738
    %v946 = vpop.f32.mrf.mxu0
    %v947 = vadd.f32 %v707, %v946
    %948 = vmatmul.f32.gmra.mxu0 %v741
    %v949 = vpop.f32.mrf.mxu0
    %v950 = vadd.f32 %v707, %v949
    %951 = vmatmul.f32.gmra.mxu0 %v744
    %v952 = vpop.f32.mrf.mxu0
    %v953 = vadd.f32 %v707, %v952
    %954 = vmatmul.f32.gmra.mxu0 %v747
    %v955 = vpop.f32.mrf.mxu0
    %v956 = vadd.f32 %v707, %v955
    %957 = vmatmul.f32.gmra.mxu0 %v750
    %v958 = vpop.f32.mrf.mxu0
    %v959 = vadd.f32 %v707, %v958
    %960 = vmatmul.f32.gmra.mxu0 %v753
    %v961 = vpop.f32.mrf.mxu0
    %v962 = vadd.f32 %v707, %v961
    %963 = vmatmul.f32.gmra.mxu0 %v756
    %v964 = vpop.f32.mrf.mxu0
    %v965 = vadd.f32 %v707, %v964
    %966 = vmatmul.f32.gmra.mxu0 %v759
    %v967 = vpop.f32.mrf.mxu0
    %v968 = vadd.f32 %v707, %v967
    %969 = vmatmul.f32.gmra.mxu0 %v762
    %v970 = vpop.f32.mrf.mxu0
    %v971 = vadd.f32 %v707, %v970
    %972 = vmatmul.f32.gmra.mxu0 %v765
    %v973 = vpop.f32.mrf.mxu0
    %v974 = vadd.f32 %v707, %v973
    %975 = vmatmul.f32.gmra.mxu0 %v768
    %v976 = vpop.f32.mrf.mxu0
    %v977 = vadd.f32 %v707, %v976
    %978 = vmatmul.f32.gmra.mxu0 %v771
    %v979 = vpop.f32.mrf.mxu0
    %v980 = vadd.f32 %v707, %v979
    %981 = vmatmul.f32.gmra.mxu0 %v774
    %v982 = vpop.f32.mrf.mxu0
    %v983 = vadd.f32 %v707, %v982
    %984 = vmatmul.f32.gmra.mxu0 %v777
    %v985 = vpop.f32.mrf.mxu0
    %v986 = vadd.f32 %v707, %v985
    %987 = vmatmul.f32.gmra.mxu0 %v780
    %v988 = vpop.f32.mrf.mxu0
    %v989 = vadd.f32 %v707, %v988
    %990 = vmatmul.f32.gmra.mxu0 %v783
    %v991 = vpop.f32.mrf.mxu0
    %v992 = vadd.f32 %v707, %v991
    %993 = vmatmul.f32.gmra.mxu0 %v786
    %v994 = vpop.f32.mrf.mxu0
    %v995 = vadd.f32 %v707, %v994
    %996 = vmatmul.f32.gmra.mxu0 %v789
    %v997 = vpop.f32.mrf.mxu0
    %v998 = vadd.f32 %v707, %v997
    %999 = vmatmul.f32.gmra.mxu0 %v792
    %v1000 = vpop.f32.mrf.mxu0
    %v1001 = vadd.f32 %v707, %v1000
    %1002 = vmatmul.f32.gmra.mxu0 %v795
    %v1003 = vpop.f32.mrf.mxu0
    %v1004 = vadd.f32 %v707, %v1003
    %1005 = vmatmul.f32.gmra.mxu0 %v798
    %v1006 = vpop.f32.mrf.mxu0
    %v1007 = vadd.f32 %v707, %v1006
    %1008 = vmatmul.f32.gmra.mxu0 %v801
    %v1009 = vpop.f32.mrf.mxu0
    %v1010 = vadd.f32 %v707, %v1009
    %1011 = vmatmul.f32.gmra.mxu0 %v804
    %v1012 = vpop.f32.mrf.mxu0
    %v1013 = vadd.f32 %v707, %v1012
    %1014 = vmatmul.f32.gmra.mxu0 %v807
    %v1015 = vpop.f32.mrf.mxu0
    %v1016 = vadd.f32 %v707, %v1015
    %1017 = vmatmul.f32.gmra.mxu0 %v810
    %v1018 = vpop.f32.mrf.mxu0
    %v1019 = vadd.f32 %v707, %v1018
    %1020 = vmatmul.f32.gmra.mxu0 %v813
    %v1021 = vpop.f32.mrf.mxu0
    %v1022 = vadd.f32 %v707, %v1021
    %1023 = vmatmul.f32.gmra.mxu0 %v816
    %v1024 = vpop.f32.mrf.mxu0
    %v1025 = vadd.f32 %v707, %v1024
    %1026 = vmatmul.f32.gmra.mxu0 %v819
    %v1027 = vpop.f32.mrf.mxu0
    %v1028 = vadd.f32 %v707, %v1027
    %1029 = vmatmul.f32.gmra.mxu0 %v822
    %v1030 = vpop.f32.mrf.mxu0
    %v1031 = vadd.f32 %v707, %v1030
    %1032 = vmatmul.f32.gmra.mxu0 %v825
    %v1033 = vpop.f32.mrf.mxu0
    %v1034 = vadd.f32 %v707, %v1033
    %1035 = vmatmul.f32.gmra.mxu0 %v828
    %v1036 = vpop.f32.mrf.mxu0
    %v1037 = vadd.f32 %v707, %v1036
    %1038 = vmatmul.f32.gmra.mxu0 %v831
    %v1039 = vpop.f32.mrf.mxu0
    %v1040 = vadd.f32 %v707, %v1039
    %1041 = vmatmul.f32.gmra.mxu0 %v834
    %v1042 = vpop.f32.mrf.mxu0
    %v1043 = vadd.f32 %v707, %v1042
    %1044 = vmatmul.f32.gmra.mxu0 %v837
    %v1045 = vpop.f32.mrf.mxu0
    %v1046 = vadd.f32 %v707, %v1045
    %1047 = vmatmul.f32.gmra.mxu0 %v840
    %v1048 = vpop.f32.mrf.mxu0
    %v1049 = vadd.f32 %v707, %v1048
    %1050 = vmatmul.f32.gmra.mxu0 %v843
    %v1051 = vpop.f32.mrf.mxu0
    %v1052 = vadd.f32 %v707, %v1051
    %1053 = vmatmul.f32.gmra.mxu0 %v846
    %v1054 = vpop.f32.mrf.mxu0
    %v1055 = vadd.f32 %v707, %v1054
    %1056 = vmatmul.f32.gmra.mxu0 %v849
    %v1057 = vpop.f32.mrf.mxu0
    %v1058 = vadd.f32 %v707, %v1057
    %1059 = vmatmul.f32.gmra.mxu0 %v852
    %v1060 = vpop.f32.mrf.mxu0
    %v1061 = vadd.f32 %v707, %v1060
    %1062 = vmatmul.f32.gmra.mxu0 %v855
    %v1063 = vpop.f32.mrf.mxu0
    %v1064 = vadd.f32 %v707, %v1063
    %1065 = vmatmul.f32.gmra.mxu0 %v858
    %v1066 = vpop.f32.mrf.mxu0
    %v1067 = vadd.f32 %v707, %v1066
    %1068 = vmatmul.f32.gmra.mxu0 %v861
    %v1069 = vpop.f32.mrf.mxu0
    %v1070 = vadd.f32 %v707, %v1069
    %1071 = vmatmul.f32.gmra.mxu0 %v864
    %v1072 = vpop.f32.mrf.mxu0
    %v1073 = vadd.f32 %v707, %v1072
    %1074 = vmatmul.f32.gmra.mxu0 %v867
    %v1075 = vpop.f32.mrf.mxu0
    %v1076 = vadd.f32 %v707, %v1075
    %1077 = vmatmul.f32.gmra.mxu0 %v870
    %v1078 = vpop.f32.mrf.mxu0
    %v1079 = vadd.f32 %v707, %v1078
    %1080 = vmatmul.f32.gmra.mxu0 %v873
    %v1081 = vpop.f32.mrf.mxu0
    %v1082 = vadd.f32 %v707, %v1081
    %1083 = vmatmul.f32.gmra.mxu0 %v876
    %v1084 = vpop.f32.mrf.mxu0
    %v1085 = vadd.f32 %v707, %v1084
    %1086 = vmatmul.f32.gmra.mxu0 %v879
    %v1087 = vpop.f32.mrf.mxu0
    %v1088 = vadd.f32 %v707, %v1087
    %1089 = vmatmul.f32.gmra.mxu0 %v882
    %v1090 = vpop.f32.mrf.mxu0
    %v1091 = vadd.f32 %v707, %v1090
    %1092 = vmatmul.f32.gmra.mxu0 %v885
    %v1093 = vpop.f32.mrf.mxu0
    %v1094 = vadd.f32 %v707, %v1093
    %1095 = vmatmul.f32.gmra.mxu0 %v888
    %v1096 = vpop.f32.mrf.mxu0
    %v1097 = vadd.f32 %v707, %v1096
    %1098 = vmatmul.f32.gmra.mxu0 %v891
    %v1099 = vpop.f32.mrf.mxu0
    %v1100 = vadd.f32 %v707, %v1099
    %1101 = vmatmul.f32.gmra.mxu0 %v894
    %v1102 = vpop.f32.mrf.mxu0
    %v1103 = vadd.f32 %v707, %v1102
    %1104 = vmatmul.f32.gmra.mxu0 %v897
    %v1105 = vpop.f32.mrf.mxu0
    %v1106 = vadd.f32 %v707, %v1105
    %1107 = vmatmul.f32.gmra.mxu0 %v900
    %v1108 = vpop.f32.mrf.mxu0
    %v1109 = vadd.f32 %v707, %v1108
    %1110 = vdwg.mxu0
    %v1111 = vmax.f32 %v920, 0.0
    %v1112 = vmax.f32 %v923, 0.0
    %v1113 = vmax.f32 %v926, 0.0
    %v1114 = vmax.f32 %v929, 0.0
    %v1115 = vmax.f32 %v932, 0.0
    %v1116 = vmax.f32 %v935, 0.0
    %v1117 = vmax.f32 %v938, 0.0
    %v1118 = vmax.f32 %v941, 0.0
    %v1119 = vmax.f32 %v944, 0.0
    %v1120 = vmax.f32 %v947, 0.0
    %v1121 = vmax.f32 %v950, 0.0
    %v1122 = vmax.f32 %v953, 0.0
    %v1123 = vmax.f32 %v956, 0.0
    %v1124 = vmax.f32 %v959, 0.0
    %v1125 = vmax.f32 %v962, 0.0
    %v1126 = vmax.f32 %v965, 0.0
    %v1127 = vmax.f32 %v968, 0.0
    %v1128 = vmax.f32 %v971, 0.0
    %v1129 = vmax.f32 %v974, 0.0
    %v1130 = vmax.f32 %v977, 0.0
    %v1131 = vmax.f32 %v980, 0.0
    %v1132 = vmax.f32 %v983, 0.0
    %v1133 = vmax.f32 %v986, 0.0
    %v1134 = vmax.f32 %v989, 0.0
    %v1135 = vmax.f32 %v992, 0.0
    %v1136 = vmax.f32 %v995, 0.0
    %v1137 = vmax.f32 %v998, 0.0
    %v1138 = vmax.f32 %v1001, 0.0
    %v1139 = vmax.f32 %v1004, 0.0
    %v1140 = vmax.f32 %v1007, 0.0
    %v1141 = vmax.f32 %v1010, 0.0
    %v1142 = vmax.f32 %v1013, 0.0
    %v1143 = vmax.f32 %v1016, 0.0
    %v1144 = vmax.f32 %v1019, 0.0
    %v1145 = vmax.f32 %v1022, 0.0
    %v1146 = vmax.f32 %v1025, 0.0
    %v1147 = vmax.f32 %v1028, 0.0
    %v1148 = vmax.f32 %v1031, 0.0
    %v1149 = vmax.f32 %v1034, 0.0
    %v1150 = vmax.f32 %v1037, 0.0
    %v1151 = vmax.f32 %v1040, 0.0
    %v1152 = vmax.f32 %v1043, 0.0
    %v1153 = vmax.f32 %v1046, 0.0
    %v1154 = vmax.f32 %v1049, 0.0
    %v1155 = vmax.f32 %v1052, 0.0
    %v1156 = vmax.f32 %v1055, 0.0
    %v1157 = vmax.f32 %v1058, 0.0
    %v1158 = vmax.f32 %v1061, 0.0
    %v1159 = vmax.f32 %v1064, 0.0
    %v1160 = vmax.f32 %v1067, 0.0
    %v1161 = vmax.f32 %v1070, 0.0
    %v1162 = vmax.f32 %v1073, 0.0
    %v1163 = vmax.f32 %v1076, 0.0
    %v1164 = vmax.f32 %v1079, 0.0
    %v1165 = vmax.f32 %v1082, 0.0
    %v1166 = vmax.f32 %v1085, 0.0
    %v1167 = vmax.f32 %v1088, 0.0
    %v1168 = vmax.f32 %v1091, 0.0
    %v1169 = vmax.f32 %v1094, 0.0
    %v1170 = vmax.f32 %v1097, 0.0
    %v1171 = vmax.f32 %v1100, 0.0
    %v1172 = vmax.f32 %v1103, 0.0
    %v1173 = vmax.f32 %v1106, 0.0
    %v1174 = vmax.f32 %v1109, 0.0
    %v1175 = vld [vmem:[%s5] sm:$0xff]
    %v1176 = vld [vmem:[%s5 + $0x8] sm:$0xff]
    %v1177 = vld [vmem:[%s5 + $0x10] sm:$0xff]
    %v1178 = vld [vmem:[%s5 + $0x18] sm:$0xff]
    %v1179 = vld [vmem:[%s5 + $0x20] sm:$0xff]
    %v1180 = vld [vmem:[%s5 + $0x28] sm:$0xff]
    %v1181 = vld [vmem:[%s5 + $0x30] sm:$0xff]
    %v1182 = vld [vmem:[%s5 + $0x38] sm:$0xff]
    %v1183 = vld [vmem:[%s5 + $0x40] sm:$0xff]
    %v1184 = vld [vmem:[%s5 + $0x48] sm:$0xff]
    %v1185 = vld [vmem:[%s5 + $0x50] sm:$0xff]
    %v1186 = vld [vmem:[%s5 + $0x58] sm:$0xff]
    %v1187 = vld [vmem:[%s5 + $0x60] sm:$0xff]
    %v1188 = vld [vmem:[%s5 + $0x68] sm:$0xff]
    %v1189 = vld [vmem:[%s5 + $0x70] sm:$0xff]
    %v1190 = vld [vmem:[%s5 + $0x78] sm:$0xff]
    %v1191 = vld [vmem:[%s5 + $0x80] sm:$0xff]
    %v1192 = vld [vmem:[%s5 + $0x88] sm:$0xff]
    %v1193 = vld [vmem:[%s5 + $0x90] sm:$0xff]
    %v1194 = vld [vmem:[%s5 + $0x98] sm:$0xff]
    %v1195 = vld [vmem:[%s5 + $0xa0] sm:$0xff]
    %v1196 = vld [vmem:[%s5 + $0xa8] sm:$0xff]
    %v1197 = vld [vmem:[%s5 + $0xb0] sm:$0xff]
    %v1198 = vld [vmem:[%s5 + $0xb8] sm:$0xff]
    %v1199 = vld [vmem:[%s5 + $0xc0] sm:$0xff]
    %v1200 = vld [vmem:[%s5 + $0xc8] sm:$0xff]
    %v1201 = vld [vmem:[%s5 + $0xd0] sm:$0xff]
    %v1202 = vld [vmem:[%s5 + $0xd8] sm:$0xff]
    %v1203 = vld [vmem:[%s5 + $0xe0] sm:$0xff]
    %v1204 = vld [vmem:[%s5 + $0xe8] sm:$0xff]
    %v1205 = vld [vmem:[%s5 + $0xf0] sm:$0xff]
    %v1206 = vld [vmem:[%s5 + $0xf8] sm:$0xff]
    %v1207 = vmul.f32 %v1111, %v1175
    %v1208 = vmul.f32 %v1112, %v1176
    %v1209 = vmul.f32 %v1113, %v1177
    %v1210 = vmul.f32 %v1114, %v1178
    %v1211 = vmul.f32 %v1115, %v1179
    %v1212 = vmul.f32 %v1116, %v1180
    %v1213 = vmul.f32 %v1117, %v1181
    %v1214 = vmul.f32 %v1118, %v1182
    %v1215 = vmul.f32 %v1119, %v1183
    %v1216 = vmul.f32 %v1120, %v1184
    %v1217 = vmul.f32 %v1121, %v1185
    %v1218 = vmul.f32 %v1122, %v1186
    %v1219 = vmul.f32 %v1123, %v1187
    %v1220 = vmul.f32 %v1124, %v1188
    %v1221 = vmul.f32 %v1125, %v1189
    %v1222 = vmul.f32 %v1126, %v1190
    %v1223 = vmul.f32 %v1127, %v1191
    %v1224 = vmul.f32 %v1128, %v1192
    %v1225 = vmul.f32 %v1129, %v1193
    %v1226 = vmul.f32 %v1130, %v1194
    %v1227 = vmul.f32 %v1131, %v1195
    %v1228 = vmul.f32 %v1132, %v1196
    %v1229 = vmul.f32 %v1133, %v1197
    %v1230 = vmul.f32 %v1134, %v1198
    %v1231 = vmul.f32 %v1135, %v1199
    %v1232 = vmul.f32 %v1136, %v1200
    %v1233 = vmul.f32 %v1137, %v1201
    %v1234 = vmul.f32 %v1138, %v1202
    %v1235 = vmul.f32 %v1139, %v1203
    %v1236 = vmul.f32 %v1140, %v1204
    %v1237 = vmul.f32 %v1141, %v1205
    %v1238 = vmul.f32 %v1142, %v1206
    %v1239 = vmul.f32 %v1143, %v1175
    %v1240 = vmul.f32 %v1144, %v1176
    %v1241 = vmul.f32 %v1145, %v1177
    %v1242 = vmul.f32 %v1146, %v1178
    %v1243 = vmul.f32 %v1147, %v1179
    %v1244 = vmul.f32 %v1148, %v1180
    %v1245 = vmul.f32 %v1149, %v1181
    %v1246 = vmul.f32 %v1150, %v1182
    %v1247 = vmul.f32 %v1151, %v1183
    %v1248 = vmul.f32 %v1152, %v1184
    %v1249 = vmul.f32 %v1153, %v1185
    %v1250 = vmul.f32 %v1154, %v1186
    %v1251 = vmul.f32 %v1155, %v1187
    %v1252 = vmul.f32 %v1156, %v1188
    %v1253 = vmul.f32 %v1157, %v1189
    %v1254 = vmul.f32 %v1158, %v1190
    %v1255 = vmul.f32 %v1159, %v1191
    %v1256 = vmul.f32 %v1160, %v1192
    %v1257 = vmul.f32 %v1161, %v1193
    %v1258 = vmul.f32 %v1162, %v1194
    %v1259 = vmul.f32 %v1163, %v1195
    %v1260 = vmul.f32 %v1164, %v1196
    %v1261 = vmul.f32 %v1165, %v1197
    %v1262 = vmul.f32 %v1166, %v1198
    %v1263 = vmul.f32 %v1167, %v1199
    %v1264 = vmul.f32 %v1168, %v1200
    %v1265 = vmul.f32 %v1169, %v1201
    %v1266 = vmul.f32 %v1170, %v1202
    %v1267 = vmul.f32 %v1171, %v1203
    %v1268 = vmul.f32 %v1172, %v1204
    %v1269 = vmul.f32 %v1173, %v1205
    %v1270 = vmul.f32 %v1174, %v1206
    %v1271 = vsel %vm709, %v1207, 0.0
    %v1272 = vsel %vm709, %v1208, 0.0
    %v1273 = vadd.f32 %v1271, %v1272
    %v1274 = vsel %vm709, %v1209, 0.0
    %v1275 = vadd.f32 %v1273, %v1274
    %v1276 = vsel %vm709, %v1210, 0.0
    %v1277 = vadd.f32 %v1275, %v1276
    %v1278 = vsel %vm709, %v1211, 0.0
    %v1279 = vadd.f32 %v1277, %v1278
    %v1280 = vsel %vm709, %v1212, 0.0
    %v1281 = vadd.f32 %v1279, %v1280
    %v1282 = vsel %vm709, %v1213, 0.0
    %v1283 = vadd.f32 %v1281, %v1282
    %v1284 = vsel %vm709, %v1214, 0.0
    %v1285 = vadd.f32 %v1283, %v1284
    %v1286 = vsel %vm709, %v1215, 0.0
    %v1287 = vadd.f32 %v1285, %v1286
    %v1288 = vsel %vm709, %v1216, 0.0
    %v1289 = vadd.f32 %v1287, %v1288
    %v1290 = vsel %vm709, %v1217, 0.0
    %v1291 = vadd.f32 %v1289, %v1290
    %v1292 = vsel %vm709, %v1218, 0.0
    %v1293 = vadd.f32 %v1291, %v1292
    %v1294 = vsel %vm709, %v1219, 0.0
    %v1295 = vadd.f32 %v1293, %v1294
    %v1296 = vsel %vm709, %v1220, 0.0
    %v1297 = vadd.f32 %v1295, %v1296
    %v1298 = vsel %vm709, %v1221, 0.0
    %v1299 = vadd.f32 %v1297, %v1298
    %v1300 = vsel %vm709, %v1222, 0.0
    %v1301 = vadd.f32 %v1299, %v1300
    %v1302 = vsel %vm709, %v1223, 0.0
    %v1303 = vadd.f32 %v1301, %v1302
    %v1304 = vsel %vm709, %v1224, 0.0
    %v1305 = vadd.f32 %v1303, %v1304
    %v1306 = vsel %vm709, %v1225, 0.0
    %v1307 = vadd.f32 %v1305, %v1306
    %v1308 = vsel %vm709, %v1226, 0.0
    %v1309 = vadd.f32 %v1307, %v1308
    %v1310 = vsel %vm709, %v1227, 0.0
    %v1311 = vadd.f32 %v1309, %v1310
    %v1312 = vsel %vm709, %v1228, 0.0
    %v1313 = vadd.f32 %v1311, %v1312
    %v1314 = vsel %vm709, %v1229, 0.0
    %v1315 = vadd.f32 %v1313, %v1314
    %v1316 = vsel %vm709, %v1230, 0.0
    %v1317 = vadd.f32 %v1315, %v1316
    %v1318 = vsel %vm709, %v1231, 0.0
    %v1319 = vadd.f32 %v1317, %v1318
    %v1320 = vsel %vm709, %v1232, 0.0
    %v1321 = vadd.f32 %v1319, %v1320
    %v1322 = vsel %vm709, %v1233, 0.0
    %v1323 = vadd.f32 %v1321, %v1322
    %v1324 = vsel %vm709, %v1234, 0.0
    %v1325 = vadd.f32 %v1323, %v1324
    %v1326 = vsel %vm709, %v1235, 0.0
    %v1327 = vadd.f32 %v1325, %v1326
    %v1328 = vsel %vm709, %v1236, 0.0
    %v1329 = vadd.f32 %v1327, %v1328
    %v1330 = vsel %vm709, %v1237, 0.0
    %v1331 = vadd.f32 %v1329, %v1330
    %v1332 = vsel %vm709, %v1238, 0.0
    %v1333 = vadd.f32 %v1331, %v1332
    %v1334 = vrot.slane %v1333, 4
    %v1335 = vadd.f32 %v1333, %v1334
    %v1336 = vrot.slane %v1335, 2
    %v1337 = vadd.f32 %v1335, %v1336
    %v1338 = vrot.slane %v1337, 1
    %v1339 = vadd.f32 %v1337, %v1338
    %v1340 = vsel %vm709, %v1239, 0.0
    %v1341 = vsel %vm709, %v1240, 0.0
    %v1342 = vadd.f32 %v1340, %v1341
    %v1343 = vsel %vm709, %v1241, 0.0
    %v1344 = vadd.f32 %v1342, %v1343
    %v1345 = vsel %vm709, %v1242, 0.0
    %v1346 = vadd.f32 %v1344, %v1345
    %v1347 = vsel %vm709, %v1243, 0.0
    %v1348 = vadd.f32 %v1346, %v1347
    %v1349 = vsel %vm709, %v1244, 0.0
    %v1350 = vadd.f32 %v1348, %v1349
    %v1351 = vsel %vm709, %v1245, 0.0
    %v1352 = vadd.f32 %v1350, %v1351
    %v1353 = vsel %vm709, %v1246, 0.0
    %v1354 = vadd.f32 %v1352, %v1353
    %v1355 = vsel %vm709, %v1247, 0.0
    %v1356 = vadd.f32 %v1354, %v1355
    %v1357 = vsel %vm709, %v1248, 0.0
    %v1358 = vadd.f32 %v1356, %v1357
    %v1359 = vsel %vm709, %v1249, 0.0
    %v1360 = vadd.f32 %v1358, %v1359
    %v1361 = vsel %vm709, %v1250, 0.0
    %v1362 = vadd.f32 %v1360, %v1361
    %v1363 = vsel %vm709, %v1251, 0.0
    %v1364 = vadd.f32 %v1362, %v1363
    %v1365 = vsel %vm709, %v1252, 0.0
    %v1366 = vadd.f32 %v1364, %v1365
    %v1367 = vsel %vm709, %v1253, 0.0
    %v1368 = vadd.f32 %v1366, %v1367
    %v1369 = vsel %vm709, %v1254, 0.0
    %v1370 = vadd.f32 %v1368, %v1369
    %v1371 = vsel %vm709, %v1255, 0.0
    %v1372 = vadd.f32 %v1370, %v1371
    %v1373 = vsel %vm709, %v1256, 0.0
    %v1374 = vadd.f32 %v1372, %v1373
    %v1375 = vsel %vm709, %v1257, 0.0
    %v1376 = vadd.f32 %v1374, %v1375
    %v1377 = vsel %vm709, %v1258, 0.0
    %v1378 = vadd.f32 %v1376, %v1377
    %v1379 = vsel %vm709, %v1259, 0.0
    %v1380 = vadd.f32 %v1378, %v1379
    %v1381 = vsel %vm709, %v1260, 0.0
    %v1382 = vadd.f32 %v1380, %v1381
    %v1383 = vsel %vm709, %v1261, 0.0
    %v1384 = vadd.f32 %v1382, %v1383
    %v1385 = vsel %vm709, %v1262, 0.0
    %v1386 = vadd.f32 %v1384, %v1385
    %v1387 = vsel %vm709, %v1263, 0.0
    %v1388 = vadd.f32 %v1386, %v1387
    %v1389 = vsel %vm709, %v1264, 0.0
    %v1390 = vadd.f32 %v1388, %v1389
    %v1391 = vsel %vm709, %v1265, 0.0
    %v1392 = vadd.f32 %v1390, %v1391
    %v1393 = vsel %vm709, %v1266, 0.0
    %v1394 = vadd.f32 %v1392, %v1393
    %v1395 = vsel %vm709, %v1267, 0.0
    %v1396 = vadd.f32 %v1394, %v1395
    %v1397 = vsel %vm709, %v1268, 0.0
    %v1398 = vadd.f32 %v1396, %v1397
    %v1399 = vsel %vm709, %v1269, 0.0
    %v1400 = vadd.f32 %v1398, %v1399
    %v1401 = vsel %vm709, %v1270, 0.0
    %v1402 = vadd.f32 %v1400, %v1401
    %v1403 = vrot.slane %v1402, 4
    %v1404 = vadd.f32 %v1402, %v1403
    %v1405 = vrot.slane %v1404, 2
    %v1406 = vadd.f32 %v1404, %v1405
    %v1407 = vrot.slane %v1406, 1
    %v1408 = vadd.f32 %v1406, %v1407
    %v1409 = vld [vmem:[%s6] sm:$0xff]
    %v1410 = vld [vmem:[%s6 + $0x8] sm:$0xff]
    %v1411 = vld [vmem:[%s6 + $0x10] sm:$0xff]
    %v1412 = vld [vmem:[%s6 + $0x18] sm:$0xff]
    %v1413 = vld [vmem:[%s6 + $0x20] sm:$0xff]
    %v1414 = vld [vmem:[%s6 + $0x28] sm:$0xff]
    %v1415 = vld [vmem:[%s6 + $0x30] sm:$0xff]
    %v1416 = vld [vmem:[%s6 + $0x38] sm:$0xff]
    %v1417 = vld [vmem:[%s7] sm:$0x1]
    %v1419 = vperm.slane %v1417, 0
    %vm1423 = vcmask 1041409
    %v1424 = vsel %vm1423, %v1408, %v1339
    %v1425 = vsel %vm709, %v1424, 0
    %1427 = vmatpush.msra.mxu0 0.0
    %1428 = vmatpush.msra.mxu0 0.0
    %1429 = vmatpush.msra.mxu0 0.0
    %1430 = vmatpush.msra.mxu0 0.0
    %1431 = vmatpush.msra.mxu0 0.0
    %1432 = vmatpush.msra.mxu0 0.0
    %1433 = vmatpush.msra.mxu0 0.0
    %1434 = vmatpush.msra.mxu0 0.0
    %1435 = vmatpush.msra.mxu0 %v1416
    %1436 = vmatpush.msra.mxu0 %v1415
    %1437 = vmatpush.msra.mxu0 %v1414
    %1438 = vmatpush.msra.mxu0 %v1413
    %1439 = vmatpush.msra.mxu0 %v1412
    %1440 = vmatpush.msra.mxu0 %v1411
    %1441 = vmatpush.msra.mxu0 %v1410
    %1442 = vmatpush.msra.mxu0 %v1409
    %1443 = vmatmul.f32.gmra.mxu0 %v1425
    %v1444 = vpop.f32.mrf.mxu0
    %v1445 = vadd.f32 %v1419, %v1444
    %1446 = vdwg.mxu0
    %v1447 = vlaneseq
    %v1448 = vand.u32 %v1447, 127
    %vm1449 = vcmp.ge.s32.totalorder %v1448, 16
    %v1450 = vxor.u32 %v1445, 2147483648
    %v1451 = vmul.f32 %v1450, 1.442695
    %v1452 = vpow.pop %v1451
    %v1453 = vadd.f32 %v1452, 1.0
    %v1454 = vrcp.pop %v1453
    %v1455 = vmul.f32 %v1453, %v1454
    %v1456 = vsub.f32 1.0, %v1455
    %v1457 = vmul.f32 %v1454, %v1456
    %v1458 = vadd.f32 %v1454, %v1457
    %vm1459 = vweird.f32 %v1453
    %vm1460 = vweird.f32 %v1454
    %vm1461 = vmor %vm1459, %vm1460
    %v1462 = vsel %vm1461, %v1454, %v1458
    %v1463 = vand.u32 2147483647, %v1453
    %vm1464 = vcmp.eq.f32.partialorder %v1463, 8.507059e+37
    %v1465 = vand.u32 %v1453, 2147483648
    %v1466 = vor.u32 1.1754944e-38, %v1465
    %v1467 = vsel %vm1464, %v1466, %v1462
    %v1468 = vmul.f32 1.0, %v1467
    %v1469 = vsel %vm1449, %v1468, %v1445
    %v1471 = vrot.slane %v1469, 1
    %vm1473 = vcmask 155648
    %1474 = vst.msk [vmem:[#allocation3] sm:$0x1] %vm1473, %v1469
    %1475 = vst.msk [vmem:[#allocation3 + $0x1] sm:$0x1] %vm1473, %v1471
    // Predicated region
    $region34: #{tpu_custom_call.1} parent=1 // pred_check
      _
    $region35: #{tpu_custom_call.1} parent=1 // pred_check_branch
      %1477 = sbr.rel (0) target = $region37
    $region36: #{tpu_custom_call.1} parent=1 // pred_region
      %1479 = vsyncadd [#allocation4], 0
      %s1480 = sshll.u32 [#allocation3], 4
      %s1481 = int_to_ptr.vmem [resolvable:$true] %s1480
      %s1482 = sshll.u32 %s8, 4
      %s1483 = int_to_ptr.hbm [resolvable:$true] %s1482
      %1488 = dma.vmem_to_hbm [thread:$0]  %s1481, 32, %s1483, [#allocation4], 16, 16, 1
    $region37: #{tpu_custom_call.1} parent=1 // pred_fallthru
      _
    // Predicated region
    $region38: #{tpu_custom_call.1} parent=1 // pred_check
      _
    $region39: #{tpu_custom_call.1} parent=1 // pred_check_branch
      %1490 = sbr.rel (0) target = $region41
    $region40: #{tpu_custom_call.1} parent=1 // pred_region
      %1492 = dma.done [#allocation4], 32
    $region41: #{tpu_custom_call.1} parent=1 // pred_fallthru
      _
    %1493 = vsyncpa [#allocation4], 1

</llo_original>
